<compile_context>
chip_gen: v7x
topology: tpu7x:2x2x1
jax: 0.10.0
libtpu: 0.0.40
codegen_flags: <defaults>
</compile_context>

<pallas_src>
import functools

import jax
import jax.numpy as jnp
from jax.experimental import pallas as pl
from jax.experimental.pallas import tpu as pltpu


def _round_up(x, m):
    return (x + m - 1) // m * m


def _decoder_kernel(x_ref, wih_ref, whh_ref, b_ref, wfc_ref, bfc_ref,
                    out_ref, xg_scr, hs_scr, *, T, Bp, Hp):
    """Fused DecoderRNN forward for the whole sequence.

    x_ref   : (T*Bp, Ep)   time-major, flattened (t, b) rows
    wih_ref : (Ep, 4Hp)    input->gates weights (gate order i, f, g, o)
    whh_ref : (Hp, 4Hp)    hidden->gates weights
    b_ref   : (1, 4Hp)     combined bias (b_ih + b_hh), f32
    wfc_ref : (Hp, Vp)     fc1 weight (transposed)
    bfc_ref : (1, Vp)      fc1 bias, f32
    out_ref : (T*Bp, Vp)   logits slab (lane-dense, Vp % 128 == 0)
    xg_scr  : VMEM (T*Bp, 4Hp) f32   precomputed input projections
    hs_scr  : VMEM (T*Bp, Hp)  f32   hidden states for all steps
    """
    # Phase 1: batched input projection for ALL time steps (one MXU matmul
    # with M = T*Bp, instead of T tiny M=B matmuls inside the serial loop).
    xg_scr[...] = (
        jnp.dot(x_ref[...], wih_ref[...], preferred_element_type=jnp.float32)
        + b_ref[...])

    whh = whh_ref[...]
    mm_dtype = whh.dtype

    h = jnp.zeros((Bp, Hp), jnp.float32)
    c = jnp.zeros((Bp, Hp), jnp.float32)

    # Phase 2: serial recurrence.  T is small and static, so a Python loop
    # fully unrolls (LLO scheduler sees across steps); only h @ Whh plus
    # elementwise gate math is on the critical path, h/c live in vregs.
    for t in range(T):
        gates = (xg_scr[t * Bp:(t + 1) * Bp, :]
                 + jnp.dot(h.astype(mm_dtype), whh,
                           preferred_element_type=jnp.float32))
        # Hp is a multiple of 128, so every gate slice is lane-aligned.
        i_g = jax.nn.sigmoid(gates[:, 0 * Hp:1 * Hp])
        f_g = jax.nn.sigmoid(gates[:, 1 * Hp:2 * Hp])
        g_g = jnp.tanh(gates[:, 2 * Hp:3 * Hp])
        o_g = jax.nn.sigmoid(gates[:, 3 * Hp:4 * Hp])
        c = f_g * c + i_g * g_g
        h = o_g * jnp.tanh(c)
        hs_scr[t * Bp:(t + 1) * Bp, :] = h      # contiguous, sublane-aligned

    # Phase 3: deferred fc projection over all steps at once, written as a
    # single lane-dense (T*Bp, Vp) slab -> unmasked vector stores.
    # NOTE: for realistic vocab sizes (V ~ 10k+), tile the Vp dimension of
    # wfc here (own grid axis / separate 'parallel' pallas_call) to respect
    # v7x's 64 MiB VMEM and use its second TensorCore.
    out_ref[...] = (
        jnp.dot(hs_scr[...].astype(mm_dtype), wfc_ref[...],
                preferred_element_type=jnp.float32)
        + bfc_ref[...]).astype(out_ref.dtype)


def decoder_rnn_forward(features, captions, params, matmul_dtype=jnp.float32):
    """Replicates DecoderRNN.forward: returns (B, T, V) logits where
    T = captions.shape[1] (features prepended, last caption token dropped).

    matmul_dtype: dtype of MXU operands (f32 everywhere, or bf16 on v6e/v7x);
    accumulation and all elementwise gate math stay f32.
    """
    emb_w = params["emb"]           # (V, E)
    wih = params["wih"]             # (E, 4H)  gate order i, f, g, o
    whh = params["whh"]             # (H, 4H)
    b = params["b"]                 # (1, 4H)  combined b_ih + b_hh
    wfc = params["wfc"]             # (H, V)
    bfc = params["bfc"]             # (1, V)

    B = features.shape[0]
    T = captions.shape[1]
    E = emb_w.shape[1]
    H = whh.shape[0]
    V = wfc.shape[1]

    Bp = _round_up(B, 8)            # f32 sublane tile
    Ep = _round_up(E, 128)          # lane-dense input columns
    Hp = _round_up(H, 128)          # lane-aligned gate slices
    Vp = _round_up(V, 128)          # lane-dense output (unmasked vst)

    # --- glue: embedding gather + prepend features, time-major (T, B, E) ---
    embeddings = jnp.take(emb_w, captions[:, :-1], axis=0)          # (B,T-1,E)
    seq = jnp.concatenate(
        [features[:, None, :].astype(emb_w.dtype), embeddings], axis=1)
    x = jnp.transpose(seq, (1, 0, 2)).astype(jnp.float32)           # (T,B,E)

    # --- zero-pad to TPU-friendly shapes (padding is mathematically inert) --
    x = jnp.pad(x, ((0, 0), (0, Bp - B), (0, Ep - E)))
    x = x.reshape(T * Bp, Ep).astype(matmul_dtype)

    def pad_gates(w):
        # (..., 4H) -> (..., 4Hp): pad each gate block separately so gate k
        # lives at columns [k*Hp, k*Hp + H) and stays lane-aligned.
        pads = [(0, 0)] * (w.ndim - 1) + [(0, Hp - H)]
        return jnp.concatenate(
            [jnp.pad(g, pads) for g in jnp.split(w, 4, axis=-1)], axis=-1)

    wih_p = pad_gates(jnp.pad(wih, ((0, Ep - E), (0, 0)))).astype(matmul_dtype)
    whh_p = pad_gates(jnp.pad(whh, ((0, Hp - H), (0, 0)))).astype(matmul_dtype)
    b_p = pad_gates(b).astype(jnp.float32)
    wfc_p = jnp.pad(wfc, ((0, Hp - H), (0, Vp - V))).astype(matmul_dtype)
    bfc_p = jnp.pad(bfc, ((0, 0), (0, Vp - V))).astype(jnp.float32)

    out = pl.pallas_call(
        functools.partial(_decoder_kernel, T=T, Bp=Bp, Hp=Hp),
        out_shape=jax.ShapeDtypeStruct((T * Bp, Vp), jnp.float32),
        grid=(1,),                       # single invocation: whole recurrence
        in_specs=[
            pl.BlockSpec((T * Bp, Ep), lambda i: (0, 0)),
            pl.BlockSpec((Ep, 4 * Hp), lambda i: (0, 0)),
            pl.BlockSpec((Hp, 4 * Hp), lambda i: (0, 0)),
            pl.BlockSpec((1, 4 * Hp), lambda i: (0, 0)),
            pl.BlockSpec((Hp, Vp), lambda i: (0, 0)),
            pl.BlockSpec((1, Vp), lambda i: (0, 0)),
        ],
        out_specs=pl.BlockSpec((T * Bp, Vp), lambda i: (0, 0)),
        scratch_shapes=[
            pltpu.VMEM((T * Bp, 4 * Hp), jnp.float32),   # x @ Wih + b
            pltpu.VMEM((T * Bp, Hp), jnp.float32),       # all h_t
        ],
        # Single grid step, so no cross-step pipelining / weight
        # double-buffering cost to worry about; recurrence is sequential.
        compiler_params=pltpu.CompilerParams(
            dimension_semantics=("arbitrary",)),
    )(x, wih_p, whh_p, b_p, wfc_p, bfc_p)

    logits = out.reshape(T, Bp, Vp)[:, :B, :V]       # strip padding
    return jnp.transpose(logits, (1, 0, 2))          # (B, T, V), batch_first


def _reference_forward(features, captions, params):
    """Pure-JAX f32 reference (same math, lax.scan over time)."""
    emb_w = params["emb"]
    embeddings = jnp.take(emb_w, captions[:, :-1], axis=0)
    seq = jnp.concatenate([features[:, None, :], embeddings], axis=1)
    x = jnp.transpose(seq, (1, 0, 2)).astype(jnp.float32)        # (T, B, E)
    B = x.shape[1]
    H = params["whh"].shape[0]

    def step(carry, xt):
        h, c = carry
        gates = xt @ params["wih"] + h @ params["whh"] + params["b"]
        i_g = jax.nn.sigmoid(gates[:, 0 * H:1 * H])
        f_g = jax.nn.sigmoid(gates[:, 1 * H:2 * H])
        g_g = jnp.tanh(gates[:, 2 * H:3 * H])
        o_g = jax.nn.sigmoid(gates[:, 3 * H:4 * H])
        c_new = f_g * c + i_g * g_g
        h_new = o_g * jnp.tanh(c_new)
        return (h_new, c_new), h_new

    h0 = jnp.zeros((B, H), jnp.float32)
    c0 = jnp.zeros((B, H), jnp.float32)
    _, hs = jax.lax.scan(step, (h0, c0), x)                      # (T, B, H)
    logits = hs @ params["wfc"] + params["bfc"]                  # (T, B, V)
    return jnp.transpose(logits, (1, 0, 2))


def init_params(key, embed_size, hidden_size, vocab_size):
    k_emb, k_wih, k_whh, k_b, k_wfc, k_bfc = jax.random.split(key, 6)
    scale = 1.0 / jnp.sqrt(hidden_size)
    return {
        "emb": jax.random.normal(k_emb, (vocab_size, embed_size), jnp.float32),
        # PyTorch LSTM gate order: i, f, g, o.  Stored transposed for x @ W.
        "wih": jax.random.uniform(k_wih, (embed_size, 4 * hidden_size),
                                  jnp.float32, -scale, scale),
        "whh": jax.random.uniform(k_whh, (hidden_size, 4 * hidden_size),
                                  jnp.float32, -scale, scale),
        # combined b_ih + b_hh
        "b": jax.random.uniform(k_b, (1, 4 * hidden_size),
                                jnp.float32, -scale, scale),
        "wfc": jax.random.uniform(k_wfc, (hidden_size, vocab_size),
                                  jnp.float32, -scale, scale),
        "bfc": jax.random.uniform(k_bfc, (1, vocab_size),
                                  jnp.float32, -scale, scale),
    }


if __name__ == "__main__":
    B = 2            # batch
    T_CAP = 8        # caption length -> LSTM sequence length = 8
    E = 32           # embed_size
    H = 32           # hidden_size
    V = 64           # vocab_size

    key = jax.random.PRNGKey(0)
    k_params, k_feat, k_cap = jax.random.split(key, 3)

    params = init_params(k_params, E, H, V)
    features = jax.random.normal(k_feat, (B, E), jnp.float32)
    captions = jax.random.randint(k_cap, (B, T_CAP), 0, V, jnp.int32)

    ref = _reference_forward(features, captions, params)

    # f32 MXU inputs: must match the f32 reference tightly.
    fwd_f32 = jax.jit(functools.partial(
        decoder_rnn_forward, params=params, matmul_dtype=jnp.float32))
    out = jax.block_until_ready(fwd_f32(features, captions))
    assert out.shape == (B, T_CAP, V), out.shape
    assert jnp.allclose(out, ref, atol=1e-4, rtol=1e-4), "f32 mismatch vs ref"

    # bf16 MXU inputs (v6e/v7x recommendation): f32 accumulation + f32 gate
    # math, so it stays close to the f32 reference.
    fwd_bf16 = jax.jit(functools.partial(
        decoder_rnn_forward, params=params, matmul_dtype=jnp.bfloat16))
    out_bf16 = jax.block_until_ready(fwd_bf16(features, captions))
    assert float(jnp.max(jnp.abs(out_bf16 - ref))) < 0.15, "bf16 mismatch"

    print("KERNEL_OK")
</pallas_src>

<mosaic_0001>
module attributes {stable_mosaic.version = 11 : i64} {
  func.func @_decoder_kernel(%arg0: i32, %arg1: memref<64x128xf32, #tpu.memory_space<vmem>>, %arg2: memref<128x512xf32, #tpu.memory_space<vmem>>, %arg3: memref<128x512xf32, #tpu.memory_space<vmem>>, %arg4: memref<1x512xf32, #tpu.memory_space<vmem>>, %arg5: memref<128x128xf32, #tpu.memory_space<vmem>>, %arg6: memref<1x128xf32, #tpu.memory_space<vmem>>, %arg7: memref<64x128xf32, #tpu.memory_space<vmem>>, %arg8: memref<64x512xf32, #tpu.memory_space<vmem>>, %arg9: memref<64x128xf32, #tpu.memory_space<vmem>>) attributes {dimension_semantics = [#tpu.dimension_semantics<arbitrary>], iteration_bounds = array<i64: 1>, scalar_prefetch = 0 : i64, scratch_operands = 2 : i64, tpu.core_type = #tpu.core_type<tc>, window_params = [{pipeline_mode = #tpu.pipeline_mode<synchronous>, transform_indices = @transform_0, window_bounds = array<i64: 64, 128>}, {pipeline_mode = #tpu.pipeline_mode<synchronous>, transform_indices = @transform_1, window_bounds = array<i64: 128, 512>}, {pipeline_mode = #tpu.pipeline_mode<synchronous>, transform_indices = @transform_2, window_bounds = array<i64: 128, 512>}, {pipeline_mode = #tpu.pipeline_mode<synchronous>, transform_indices = @transform_3, window_bounds = array<i64: 1, 512>}, {pipeline_mode = #tpu.pipeline_mode<synchronous>, transform_indices = @transform_4, window_bounds = array<i64: 128, 128>}, {pipeline_mode = #tpu.pipeline_mode<synchronous>, transform_indices = @transform_5, window_bounds = array<i64: 1, 128>}, {pipeline_mode = #tpu.pipeline_mode<synchronous>, transform_indices = @transform_6, window_bounds = array<i64: 64, 128>}]} {
    %c0 = arith.constant 0 : index
    %c0_0 = arith.constant 0 : index
    %0 = vector.load %arg1[%c0, %c0_0] : memref<64x128xf32, #tpu.memory_space<vmem>>, vector<64x128xf32>
    %c0_1 = arith.constant 0 : index
    %c0_2 = arith.constant 0 : index
    %1 = vector.load %arg2[%c0_1, %c0_2] : memref<128x512xf32, #tpu.memory_space<vmem>>, vector<128x512xf32>
    %cst = arith.constant dense<0.000000e+00> : vector<64x512xf32>
    %2 = tpu.matmul %0, %1, %cst {dimension_numbers = #tpu.dot_dimension_numbers<[1], [0], [0], [1], [0, 0, 1, 1], [], []>} : vector<64x128xf32>, vector<128x512xf32>, vector<64x512xf32> -> vector<64x512xf32>
    %c0_3 = arith.constant 0 : index
    %c0_4 = arith.constant 0 : index
    %3 = vector.load %arg4[%c0_3, %c0_4] : memref<1x512xf32, #tpu.memory_space<vmem>>, vector<1x512xf32>
    %4 = vector.broadcast %3 : vector<1x512xf32> to vector<64x512xf32>
    %5 = arith.addf %2, %4 : vector<64x512xf32>
    %c0_5 = arith.constant 0 : index
    %c0_6 = arith.constant 0 : index
    %6 = vector.load %arg8[%c0_5, %c0_6] : memref<64x512xf32, #tpu.memory_space<vmem>>, vector<64x512xf32>
    tpu.vector_store %arg8[%c0_5, %c0_6], %5 {strides = array<i32>} : memref<64x512xf32, #tpu.memory_space<vmem>>, vector<64x512xf32>,
    %c0_7 = arith.constant 0 : index
    %c0_8 = arith.constant 0 : index
    %7 = vector.load %arg3[%c0_7, %c0_8] : memref<128x512xf32, #tpu.memory_space<vmem>>, vector<128x512xf32>
    %cst_9 = arith.constant 0.000000e+00 : f32
    %8 = vector.broadcast %cst_9 : f32 to vector<8x128xf32>
    %cst_10 = arith.constant 0.000000e+00 : f32
    %9 = vector.broadcast %cst_10 : f32 to vector<8x128xf32>
    %c0_11 = arith.constant 0 : index
    %c0_12 = arith.constant 0 : index
    %10 = vector.load %arg8[%c0_11, %c0_12] : memref<64x512xf32, #tpu.memory_space<vmem>>, vector<8x512xf32>
    %cst_13 = arith.constant dense<0.000000e+00> : vector<8x512xf32>
    %11 = tpu.matmul %8, %7, %cst_13 {dimension_numbers = #tpu.dot_dimension_numbers<[1], [0], [0], [1], [0, 0, 1, 1], [], []>} : vector<8x128xf32>, vector<128x512xf32>, vector<8x512xf32> -> vector<8x512xf32>
    %12 = arith.addf %10, %11 : vector<8x512xf32>
    %13 = vector.extract_strided_slice %12 {offsets = [0, 0], sizes = [8, 128], strides = [1, 1]} : vector<8x512xf32> to vector<8x128xf32>
    %14 = arith.negf %13 : vector<8x128xf32>
    %15 = math.exp %14 : vector<8x128xf32>
    %cst_14 = arith.constant 1.000000e+00 : f32
    %16 = vector.broadcast %cst_14 : f32 to vector<8x128xf32>
    %17 = arith.addf %16, %15 : vector<8x128xf32>
    %18 = arith.divf %16, %17 : vector<8x128xf32>
    %19 = vector.extract_strided_slice %12 {offsets = [0, 128], sizes = [8, 128], strides = [1, 1]} : vector<8x512xf32> to vector<8x128xf32>
    %20 = arith.negf %19 : vector<8x128xf32>
    %21 = math.exp %20 : vector<8x128xf32>
    %cst_15 = arith.constant 1.000000e+00 : f32
    %22 = vector.broadcast %cst_15 : f32 to vector<8x128xf32>
    %23 = arith.addf %22, %21 : vector<8x128xf32>
    %24 = arith.divf %22, %23 : vector<8x128xf32>
    %25 = vector.extract_strided_slice %12 {offsets = [0, 256], sizes = [8, 128], strides = [1, 1]} : vector<8x512xf32> to vector<8x128xf32>
    %26 = math.tanh %25 : vector<8x128xf32>
    %27 = vector.extract_strided_slice %12 {offsets = [0, 384], sizes = [8, 128], strides = [1, 1]} : vector<8x512xf32> to vector<8x128xf32>
    %28 = arith.negf %27 : vector<8x128xf32>
    %29 = math.exp %28 : vector<8x128xf32>
    %cst_16 = arith.constant 1.000000e+00 : f32
    %30 = vector.broadcast %cst_16 : f32 to vector<8x128xf32>
    %31 = arith.addf %30, %29 : vector<8x128xf32>
    %32 = arith.divf %30, %31 : vector<8x128xf32>
    %33 = arith.mulf %24, %9 : vector<8x128xf32>
    %34 = arith.mulf %18, %26 : vector<8x128xf32>
    %35 = arith.addf %33, %34 : vector<8x128xf32>
    %36 = math.tanh %35 : vector<8x128xf32>
    %37 = arith.mulf %32, %36 : vector<8x128xf32>
    %c0_17 = arith.constant 0 : index
    %c0_18 = arith.constant 0 : index
    %38 = vector.load %arg9[%c0_17, %c0_18] : memref<64x128xf32, #tpu.memory_space<vmem>>, vector<8x128xf32>
    tpu.vector_store %arg9[%c0_17, %c0_18], %37 {strides = array<i32>} : memref<64x128xf32, #tpu.memory_space<vmem>>, vector<8x128xf32>,
    %c8 = arith.constant 8 : index
    %c0_19 = arith.constant 0 : index
    %39 = vector.load %arg8[%c8, %c0_19] : memref<64x512xf32, #tpu.memory_space<vmem>>, vector<8x512xf32>
    %cst_20 = arith.constant dense<0.000000e+00> : vector<8x512xf32>
    %40 = tpu.matmul %37, %7, %cst_20 {dimension_numbers = #tpu.dot_dimension_numbers<[1], [0], [0], [1], [0, 0, 1, 1], [], []>} : vector<8x128xf32>, vector<128x512xf32>, vector<8x512xf32> -> vector<8x512xf32>
    %41 = arith.addf %39, %40 : vector<8x512xf32>
    %42 = vector.extract_strided_slice %41 {offsets = [0, 0], sizes = [8, 128], strides = [1, 1]} : vector<8x512xf32> to vector<8x128xf32>
    %43 = arith.negf %42 : vector<8x128xf32>
    %44 = math.exp %43 : vector<8x128xf32>
    %cst_21 = arith.constant 1.000000e+00 : f32
    %45 = vector.broadcast %cst_21 : f32 to vector<8x128xf32>
    %46 = arith.addf %45, %44 : vector<8x128xf32>
    %47 = arith.divf %45, %46 : vector<8x128xf32>
    %48 = vector.extract_strided_slice %41 {offsets = [0, 128], sizes = [8, 128], strides = [1, 1]} : vector<8x512xf32> to vector<8x128xf32>
    %49 = arith.negf %48 : vector<8x128xf32>
    %50 = math.exp %49 : vector<8x128xf32>
    %cst_22 = arith.constant 1.000000e+00 : f32
    %51 = vector.broadcast %cst_22 : f32 to vector<8x128xf32>
    %52 = arith.addf %51, %50 : vector<8x128xf32>
    %53 = arith.divf %51, %52 : vector<8x128xf32>
    %54 = vector.extract_strided_slice %41 {offsets = [0, 256], sizes = [8, 128], strides = [1, 1]} : vector<8x512xf32> to vector<8x128xf32>
    %55 = math.tanh %54 : vector<8x128xf32>
    %56 = vector.extract_strided_slice %41 {offsets = [0, 384], sizes = [8, 128], strides = [1, 1]} : vector<8x512xf32> to vector<8x128xf32>
    %57 = arith.negf %56 : vector<8x128xf32>
    %58 = math.exp %57 : vector<8x128xf32>
    %cst_23 = arith.constant 1.000000e+00 : f32
    %59 = vector.broadcast %cst_23 : f32 to vector<8x128xf32>
    %60 = arith.addf %59, %58 : vector<8x128xf32>
    %61 = arith.divf %59, %60 : vector<8x128xf32>
    %62 = arith.mulf %53, %35 : vector<8x128xf32>
    %63 = arith.mulf %47, %55 : vector<8x128xf32>
    %64 = arith.addf %62, %63 : vector<8x128xf32>
    %65 = math.tanh %64 : vector<8x128xf32>
    %66 = arith.mulf %61, %65 : vector<8x128xf32>
    %c8_24 = arith.constant 8 : index
    %c0_25 = arith.constant 0 : index
    %67 = vector.load %arg9[%c8_24, %c0_25] : memref<64x128xf32, #tpu.memory_space<vmem>>, vector<8x128xf32>
    tpu.vector_store %arg9[%c8_24, %c0_25], %66 {strides = array<i32>} : memref<64x128xf32, #tpu.memory_space<vmem>>, vector<8x128xf32>,
    %c16 = arith.constant 16 : index
    %c0_26 = arith.constant 0 : index
    %68 = vector.load %arg8[%c16, %c0_26] : memref<64x512xf32, #tpu.memory_space<vmem>>, vector<8x512xf32>
    %cst_27 = arith.constant dense<0.000000e+00> : vector<8x512xf32>
    %69 = tpu.matmul %66, %7, %cst_27 {dimension_numbers = #tpu.dot_dimension_numbers<[1], [0], [0], [1], [0, 0, 1, 1], [], []>} : vector<8x128xf32>, vector<128x512xf32>, vector<8x512xf32> -> vector<8x512xf32>
    %70 = arith.addf %68, %69 : vector<8x512xf32>
    %71 = vector.extract_strided_slice %70 {offsets = [0, 0], sizes = [8, 128], strides = [1, 1]} : vector<8x512xf32> to vector<8x128xf32>
    %72 = arith.negf %71 : vector<8x128xf32>
    %73 = math.exp %72 : vector<8x128xf32>
    %cst_28 = arith.constant 1.000000e+00 : f32
    %74 = vector.broadcast %cst_28 : f32 to vector<8x128xf32>
    %75 = arith.addf %74, %73 : vector<8x128xf32>
    %76 = arith.divf %74, %75 : vector<8x128xf32>
    %77 = vector.extract_strided_slice %70 {offsets = [0, 128], sizes = [8, 128], strides = [1, 1]} : vector<8x512xf32> to vector<8x128xf32>
    %78 = arith.negf %77 : vector<8x128xf32>
    %79 = math.exp %78 : vector<8x128xf32>
    %cst_29 = arith.constant 1.000000e+00 : f32
    %80 = vector.broadcast %cst_29 : f32 to vector<8x128xf32>
    %81 = arith.addf %80, %79 : vector<8x128xf32>
    %82 = arith.divf %80, %81 : vector<8x128xf32>
    %83 = vector.extract_strided_slice %70 {offsets = [0, 256], sizes = [8, 128], strides = [1, 1]} : vector<8x512xf32> to vector<8x128xf32>
    %84 = math.tanh %83 : vector<8x128xf32>
    %85 = vector.extract_strided_slice %70 {offsets = [0, 384], sizes = [8, 128], strides = [1, 1]} : vector<8x512xf32> to vector<8x128xf32>
    %86 = arith.negf %85 : vector<8x128xf32>
    %87 = math.exp %86 : vector<8x128xf32>
    %cst_30 = arith.constant 1.000000e+00 : f32
    %88 = vector.broadcast %cst_30 : f32 to vector<8x128xf32>
    %89 = arith.addf %88, %87 : vector<8x128xf32>
    %90 = arith.divf %88, %89 : vector<8x128xf32>
    %91 = arith.mulf %82, %64 : vector<8x128xf32>
    %92 = arith.mulf %76, %84 : vector<8x128xf32>
    %93 = arith.addf %91, %92 : vector<8x128xf32>
    %94 = math.tanh %93 : vector<8x128xf32>
    %95 = arith.mulf %90, %94 : vector<8x128xf32>
    %c16_31 = arith.constant 16 : index
    %c0_32 = arith.constant 0 : index
    %96 = vector.load %arg9[%c16_31, %c0_32] : memref<64x128xf32, #tpu.memory_space<vmem>>, vector<8x128xf32>
    tpu.vector_store %arg9[%c16_31, %c0_32], %95 {strides = array<i32>} : memref<64x128xf32, #tpu.memory_space<vmem>>, vector<8x128xf32>,
    %c24 = arith.constant 24 : index
    %c0_33 = arith.constant 0 : index
    %97 = vector.load %arg8[%c24, %c0_33] : memref<64x512xf32, #tpu.memory_space<vmem>>, vector<8x512xf32>
    %cst_34 = arith.constant dense<0.000000e+00> : vector<8x512xf32>
    %98 = tpu.matmul %95, %7, %cst_34 {dimension_numbers = #tpu.dot_dimension_numbers<[1], [0], [0], [1], [0, 0, 1, 1], [], []>} : vector<8x128xf32>, vector<128x512xf32>, vector<8x512xf32> -> vector<8x512xf32>
    %99 = arith.addf %97, %98 : vector<8x512xf32>
    %100 = vector.extract_strided_slice %99 {offsets = [0, 0], sizes = [8, 128], strides = [1, 1]} : vector<8x512xf32> to vector<8x128xf32>
    %101 = arith.negf %100 : vector<8x128xf32>
    %102 = math.exp %101 : vector<8x128xf32>
    %cst_35 = arith.constant 1.000000e+00 : f32
    %103 = vector.broadcast %cst_35 : f32 to vector<8x128xf32>
    %104 = arith.addf %103, %102 : vector<8x128xf32>
    %105 = arith.divf %103, %104 : vector<8x128xf32>
    %106 = vector.extract_strided_slice %99 {offsets = [0, 128], sizes = [8, 128], strides = [1, 1]} : vector<8x512xf32> to vector<8x128xf32>
    %107 = arith.negf %106 : vector<8x128xf32>
    %108 = math.exp %107 : vector<8x128xf32>
    %cst_36 = arith.constant 1.000000e+00 : f32
    %109 = vector.broadcast %cst_36 : f32 to vector<8x128xf32>
    %110 = arith.addf %109, %108 : vector<8x128xf32>
    %111 = arith.divf %109, %110 : vector<8x128xf32>
    %112 = vector.extract_strided_slice %99 {offsets = [0, 256], sizes = [8, 128], strides = [1, 1]} : vector<8x512xf32> to vector<8x128xf32>
    %113 = math.tanh %112 : vector<8x128xf32>
    %114 = vector.extract_strided_slice %99 {offsets = [0, 384], sizes = [8, 128], strides = [1, 1]} : vector<8x512xf32> to vector<8x128xf32>
    %115 = arith.negf %114 : vector<8x128xf32>
    %116 = math.exp %115 : vector<8x128xf32>
    %cst_37 = arith.constant 1.000000e+00 : f32
    %117 = vector.broadcast %cst_37 : f32 to vector<8x128xf32>
    %118 = arith.addf %117, %116 : vector<8x128xf32>
    %119 = arith.divf %117, %118 : vector<8x128xf32>
    %120 = arith.mulf %111, %93 : vector<8x128xf32>
    %121 = arith.mulf %105, %113 : vector<8x128xf32>
    %122 = arith.addf %120, %121 : vector<8x128xf32>
    %123 = math.tanh %122 : vector<8x128xf32>
    %124 = arith.mulf %119, %123 : vector<8x128xf32>
    %c24_38 = arith.constant 24 : index
    %c0_39 = arith.constant 0 : index
    %125 = vector.load %arg9[%c24_38, %c0_39] : memref<64x128xf32, #tpu.memory_space<vmem>>, vector<8x128xf32>
    tpu.vector_store %arg9[%c24_38, %c0_39], %124 {strides = array<i32>} : memref<64x128xf32, #tpu.memory_space<vmem>>, vector<8x128xf32>,
    %c32 = arith.constant 32 : index
    %c0_40 = arith.constant 0 : index
    %126 = vector.load %arg8[%c32, %c0_40] : memref<64x512xf32, #tpu.memory_space<vmem>>, vector<8x512xf32>
    %cst_41 = arith.constant dense<0.000000e+00> : vector<8x512xf32>
    %127 = tpu.matmul %124, %7, %cst_41 {dimension_numbers = #tpu.dot_dimension_numbers<[1], [0], [0], [1], [0, 0, 1, 1], [], []>} : vector<8x128xf32>, vector<128x512xf32>, vector<8x512xf32> -> vector<8x512xf32>
    %128 = arith.addf %126, %127 : vector<8x512xf32>
    %129 = vector.extract_strided_slice %128 {offsets = [0, 0], sizes = [8, 128], strides = [1, 1]} : vector<8x512xf32> to vector<8x128xf32>
    %130 = arith.negf %129 : vector<8x128xf32>
    %131 = math.exp %130 : vector<8x128xf32>
    %cst_42 = arith.constant 1.000000e+00 : f32
    %132 = vector.broadcast %cst_42 : f32 to vector<8x128xf32>
    %133 = arith.addf %132, %131 : vector<8x128xf32>
    %134 = arith.divf %132, %133 : vector<8x128xf32>
    %135 = vector.extract_strided_slice %128 {offsets = [0, 128], sizes = [8, 128], strides = [1, 1]} : vector<8x512xf32> to vector<8x128xf32>
    %136 = arith.negf %135 : vector<8x128xf32>
    %137 = math.exp %136 : vector<8x128xf32>
    %cst_43 = arith.constant 1.000000e+00 : f32
    %138 = vector.broadcast %cst_43 : f32 to vector<8x128xf32>
    %139 = arith.addf %138, %137 : vector<8x128xf32>
    %140 = arith.divf %138, %139 : vector<8x128xf32>
    %141 = vector.extract_strided_slice %128 {offsets = [0, 256], sizes = [8, 128], strides = [1, 1]} : vector<8x512xf32> to vector<8x128xf32>
    %142 = math.tanh %141 : vector<8x128xf32>
    %143 = vector.extract_strided_slice %128 {offsets = [0, 384], sizes = [8, 128], strides = [1, 1]} : vector<8x512xf32> to vector<8x128xf32>
    %144 = arith.negf %143 : vector<8x128xf32>
    %145 = math.exp %144 : vector<8x128xf32>
    %cst_44 = arith.constant 1.000000e+00 : f32
    %146 = vector.broadcast %cst_44 : f32 to vector<8x128xf32>
    %147 = arith.addf %146, %145 : vector<8x128xf32>
    %148 = arith.divf %146, %147 : vector<8x128xf32>
    %149 = arith.mulf %140, %122 : vector<8x128xf32>
    %150 = arith.mulf %134, %142 : vector<8x128xf32>
    %151 = arith.addf %149, %150 : vector<8x128xf32>
    %152 = math.tanh %151 : vector<8x128xf32>
    %153 = arith.mulf %148, %152 : vector<8x128xf32>
    %c32_45 = arith.constant 32 : index
    %c0_46 = arith.constant 0 : index
    %154 = vector.load %arg9[%c32_45, %c0_46] : memref<64x128xf32, #tpu.memory_space<vmem>>, vector<8x128xf32>
    tpu.vector_store %arg9[%c32_45, %c0_46], %153 {strides = array<i32>} : memref<64x128xf32, #tpu.memory_space<vmem>>, vector<8x128xf32>,
    %c40 = arith.constant 40 : index
    %c0_47 = arith.constant 0 : index
    %155 = vector.load %arg8[%c40, %c0_47] : memref<64x512xf32, #tpu.memory_space<vmem>>, vector<8x512xf32>
    %cst_48 = arith.constant dense<0.000000e+00> : vector<8x512xf32>
    %156 = tpu.matmul %153, %7, %cst_48 {dimension_numbers = #tpu.dot_dimension_numbers<[1], [0], [0], [1], [0, 0, 1, 1], [], []>} : vector<8x128xf32>, vector<128x512xf32>, vector<8x512xf32> -> vector<8x512xf32>
    %157 = arith.addf %155, %156 : vector<8x512xf32>
    %158 = vector.extract_strided_slice %157 {offsets = [0, 0], sizes = [8, 128], strides = [1, 1]} : vector<8x512xf32> to vector<8x128xf32>
    %159 = arith.negf %158 : vector<8x128xf32>
    %160 = math.exp %159 : vector<8x128xf32>
    %cst_49 = arith.constant 1.000000e+00 : f32
    %161 = vector.broadcast %cst_49 : f32 to vector<8x128xf32>
    %162 = arith.addf %161, %160 : vector<8x128xf32>
    %163 = arith.divf %161, %162 : vector<8x128xf32>
    %164 = vector.extract_strided_slice %157 {offsets = [0, 128], sizes = [8, 128], strides = [1, 1]} : vector<8x512xf32> to vector<8x128xf32>
    %165 = arith.negf %164 : vector<8x128xf32>
    %166 = math.exp %165 : vector<8x128xf32>
    %cst_50 = arith.constant 1.000000e+00 : f32
    %167 = vector.broadcast %cst_50 : f32 to vector<8x128xf32>
    %168 = arith.addf %167, %166 : vector<8x128xf32>
    %169 = arith.divf %167, %168 : vector<8x128xf32>
    %170 = vector.extract_strided_slice %157 {offsets = [0, 256], sizes = [8, 128], strides = [1, 1]} : vector<8x512xf32> to vector<8x128xf32>
    %171 = math.tanh %170 : vector<8x128xf32>
    %172 = vector.extract_strided_slice %157 {offsets = [0, 384], sizes = [8, 128], strides = [1, 1]} : vector<8x512xf32> to vector<8x128xf32>
    %173 = arith.negf %172 : vector<8x128xf32>
    %174 = math.exp %173 : vector<8x128xf32>
    %cst_51 = arith.constant 1.000000e+00 : f32
    %175 = vector.broadcast %cst_51 : f32 to vector<8x128xf32>
    %176 = arith.addf %175, %174 : vector<8x128xf32>
    %177 = arith.divf %175, %176 : vector<8x128xf32>
    %178 = arith.mulf %169, %151 : vector<8x128xf32>
    %179 = arith.mulf %163, %171 : vector<8x128xf32>
    %180 = arith.addf %178, %179 : vector<8x128xf32>
    %181 = math.tanh %180 : vector<8x128xf32>
    %182 = arith.mulf %177, %181 : vector<8x128xf32>
    %c40_52 = arith.constant 40 : index
    %c0_53 = arith.constant 0 : index
    %183 = vector.load %arg9[%c40_52, %c0_53] : memref<64x128xf32, #tpu.memory_space<vmem>>, vector<8x128xf32>
    tpu.vector_store %arg9[%c40_52, %c0_53], %182 {strides = array<i32>} : memref<64x128xf32, #tpu.memory_space<vmem>>, vector<8x128xf32>,
    %c48 = arith.constant 48 : index
    %c0_54 = arith.constant 0 : index
    %184 = vector.load %arg8[%c48, %c0_54] : memref<64x512xf32, #tpu.memory_space<vmem>>, vector<8x512xf32>
    %cst_55 = arith.constant dense<0.000000e+00> : vector<8x512xf32>
    %185 = tpu.matmul %182, %7, %cst_55 {dimension_numbers = #tpu.dot_dimension_numbers<[1], [0], [0], [1], [0, 0, 1, 1], [], []>} : vector<8x128xf32>, vector<128x512xf32>, vector<8x512xf32> -> vector<8x512xf32>
    %186 = arith.addf %184, %185 : vector<8x512xf32>
    %187 = vector.extract_strided_slice %186 {offsets = [0, 0], sizes = [8, 128], strides = [1, 1]} : vector<8x512xf32> to vector<8x128xf32>
    %188 = arith.negf %187 : vector<8x128xf32>
    %189 = math.exp %188 : vector<8x128xf32>
    %cst_56 = arith.constant 1.000000e+00 : f32
    %190 = vector.broadcast %cst_56 : f32 to vector<8x128xf32>
    %191 = arith.addf %190, %189 : vector<8x128xf32>
    %192 = arith.divf %190, %191 : vector<8x128xf32>
    %193 = vector.extract_strided_slice %186 {offsets = [0, 128], sizes = [8, 128], strides = [1, 1]} : vector<8x512xf32> to vector<8x128xf32>
    %194 = arith.negf %193 : vector<8x128xf32>
    %195 = math.exp %194 : vector<8x128xf32>
    %cst_57 = arith.constant 1.000000e+00 : f32
    %196 = vector.broadcast %cst_57 : f32 to vector<8x128xf32>
    %197 = arith.addf %196, %195 : vector<8x128xf32>
    %198 = arith.divf %196, %197 : vector<8x128xf32>
    %199 = vector.extract_strided_slice %186 {offsets = [0, 256], sizes = [8, 128], strides = [1, 1]} : vector<8x512xf32> to vector<8x128xf32>
    %200 = math.tanh %199 : vector<8x128xf32>
    %201 = vector.extract_strided_slice %186 {offsets = [0, 384], sizes = [8, 128], strides = [1, 1]} : vector<8x512xf32> to vector<8x128xf32>
    %202 = arith.negf %201 : vector<8x128xf32>
    %203 = math.exp %202 : vector<8x128xf32>
    %cst_58 = arith.constant 1.000000e+00 : f32
    %204 = vector.broadcast %cst_58 : f32 to vector<8x128xf32>
    %205 = arith.addf %204, %203 : vector<8x128xf32>
    %206 = arith.divf %204, %205 : vector<8x128xf32>
    %207 = arith.mulf %198, %180 : vector<8x128xf32>
    %208 = arith.mulf %192, %200 : vector<8x128xf32>
    %209 = arith.addf %207, %208 : vector<8x128xf32>
    %210 = math.tanh %209 : vector<8x128xf32>
    %211 = arith.mulf %206, %210 : vector<8x128xf32>
    %c48_59 = arith.constant 48 : index
    %c0_60 = arith.constant 0 : index
    %212 = vector.load %arg9[%c48_59, %c0_60] : memref<64x128xf32, #tpu.memory_space<vmem>>, vector<8x128xf32>
    tpu.vector_store %arg9[%c48_59, %c0_60], %211 {strides = array<i32>} : memref<64x128xf32, #tpu.memory_space<vmem>>, vector<8x128xf32>,
    %c56 = arith.constant 56 : index
    %c0_61 = arith.constant 0 : index
    %213 = vector.load %arg8[%c56, %c0_61] : memref<64x512xf32, #tpu.memory_space<vmem>>, vector<8x512xf32>
    %cst_62 = arith.constant dense<0.000000e+00> : vector<8x512xf32>
    %214 = tpu.matmul %211, %7, %cst_62 {dimension_numbers = #tpu.dot_dimension_numbers<[1], [0], [0], [1], [0, 0, 1, 1], [], []>} : vector<8x128xf32>, vector<128x512xf32>, vector<8x512xf32> -> vector<8x512xf32>
    %215 = arith.addf %213, %214 : vector<8x512xf32>
    %216 = vector.extract_strided_slice %215 {offsets = [0, 0], sizes = [8, 128], strides = [1, 1]} : vector<8x512xf32> to vector<8x128xf32>
    %217 = arith.negf %216 : vector<8x128xf32>
    %218 = math.exp %217 : vector<8x128xf32>
    %cst_63 = arith.constant 1.000000e+00 : f32
    %219 = vector.broadcast %cst_63 : f32 to vector<8x128xf32>
    %220 = arith.addf %219, %218 : vector<8x128xf32>
    %221 = arith.divf %219, %220 : vector<8x128xf32>
    %222 = vector.extract_strided_slice %215 {offsets = [0, 128], sizes = [8, 128], strides = [1, 1]} : vector<8x512xf32> to vector<8x128xf32>
    %223 = arith.negf %222 : vector<8x128xf32>
    %224 = math.exp %223 : vector<8x128xf32>
    %cst_64 = arith.constant 1.000000e+00 : f32
    %225 = vector.broadcast %cst_64 : f32 to vector<8x128xf32>
    %226 = arith.addf %225, %224 : vector<8x128xf32>
    %227 = arith.divf %225, %226 : vector<8x128xf32>
    %228 = vector.extract_strided_slice %215 {offsets = [0, 256], sizes = [8, 128], strides = [1, 1]} : vector<8x512xf32> to vector<8x128xf32>
    %229 = math.tanh %228 : vector<8x128xf32>
    %230 = vector.extract_strided_slice %215 {offsets = [0, 384], sizes = [8, 128], strides = [1, 1]} : vector<8x512xf32> to vector<8x128xf32>
    %231 = arith.negf %230 : vector<8x128xf32>
    %232 = math.exp %231 : vector<8x128xf32>
    %cst_65 = arith.constant 1.000000e+00 : f32
    %233 = vector.broadcast %cst_65 : f32 to vector<8x128xf32>
    %234 = arith.addf %233, %232 : vector<8x128xf32>
    %235 = arith.divf %233, %234 : vector<8x128xf32>
    %236 = arith.mulf %227, %209 : vector<8x128xf32>
    %237 = arith.mulf %221, %229 : vector<8x128xf32>
    %238 = arith.addf %236, %237 : vector<8x128xf32>
    %239 = math.tanh %238 : vector<8x128xf32>
    %240 = arith.mulf %235, %239 : vector<8x128xf32>
    %c56_66 = arith.constant 56 : index
    %c0_67 = arith.constant 0 : index
    %241 = vector.load %arg9[%c56_66, %c0_67] : memref<64x128xf32, #tpu.memory_space<vmem>>, vector<8x128xf32>
    tpu.vector_store %arg9[%c56_66, %c0_67], %240 {strides = array<i32>} : memref<64x128xf32, #tpu.memory_space<vmem>>, vector<8x128xf32>,
    %c0_68 = arith.constant 0 : index
    %c0_69 = arith.constant 0 : index
    %242 = vector.load %arg9[%c0_68, %c0_69] : memref<64x128xf32, #tpu.memory_space<vmem>>, vector<64x128xf32>
    %c0_70 = arith.constant 0 : index
    %c0_71 = arith.constant 0 : index
    %243 = vector.load %arg5[%c0_70, %c0_71] : memref<128x128xf32, #tpu.memory_space<vmem>>, vector<128x128xf32>
    %cst_72 = arith.constant dense<0.000000e+00> : vector<64x128xf32>
    %244 = tpu.matmul %242, %243, %cst_72 {dimension_numbers = #tpu.dot_dimension_numbers<[1], [0], [0], [1], [0, 0, 1, 1], [], []>} : vector<64x128xf32>, vector<128x128xf32>, vector<64x128xf32> -> vector<64x128xf32>
    %c0_73 = arith.constant 0 : index
    %c0_74 = arith.constant 0 : index
    %245 = vector.load %arg6[%c0_73, %c0_74] : memref<1x128xf32, #tpu.memory_space<vmem>>, vector<1x128xf32>
    %246 = vector.broadcast %245 : vector<1x128xf32> to vector<64x128xf32>
    %247 = arith.addf %244, %246 : vector<64x128xf32>
    %c0_75 = arith.constant 0 : index
    %c0_76 = arith.constant 0 : index
    %248 = vector.load %arg7[%c0_75, %c0_76] : memref<64x128xf32, #tpu.memory_space<vmem>>, vector<64x128xf32>
    tpu.vector_store %arg7[%c0_75, %c0_76], %247 {strides = array<i32>} : memref<64x128xf32, #tpu.memory_space<vmem>>, vector<64x128xf32>,
    return
  }
  func.func @transform_0(%arg0: i32) -> (i32, i32) {
    %c0_i32 = arith.constant 0 : i32
    %c0_i32_0 = arith.constant 0 : i32
    %c0_i32_1 = arith.constant 0 : i32
    return %c0_i32, %c0_i32_0 : i32, i32
  }
  func.func @transform_1(%arg0: i32) -> (i32, i32) {
    %c0_i32 = arith.constant 0 : i32
    %c0_i32_0 = arith.constant 0 : i32
    %c0_i32_1 = arith.constant 0 : i32
    return %c0_i32, %c0_i32_0 : i32, i32
  }
  func.func @transform_2(%arg0: i32) -> (i32, i32) {
    %c0_i32 = arith.constant 0 : i32
    %c0_i32_0 = arith.constant 0 : i32
    %c0_i32_1 = arith.constant 0 : i32
    return %c0_i32, %c0_i32_0 : i32, i32
  }
  func.func @transform_3(%arg0: i32) -> (i32, i32) {
    %c0_i32 = arith.constant 0 : i32
    %c0_i32_0 = arith.constant 0 : i32
    %c0_i32_1 = arith.constant 0 : i32
    return %c0_i32, %c0_i32_0 : i32, i32
  }
  func.func @transform_4(%arg0: i32) -> (i32, i32) {
    %c0_i32 = arith.constant 0 : i32
    %c0_i32_0 = arith.constant 0 : i32
    %c0_i32_1 = arith.constant 0 : i32
    return %c0_i32, %c0_i32_0 : i32, i32
  }
  func.func @transform_5(%arg0: i32) -> (i32, i32) {
    %c0_i32 = arith.constant 0 : i32
    %c0_i32_0 = arith.constant 0 : i32
    %c0_i32_1 = arith.constant 0 : i32
    return %c0_i32, %c0_i32_0 : i32, i32
  }
  func.func @transform_6(%arg0: i32) -> (i32, i32) {
    %c0_i32 = arith.constant 0 : i32
    %c0_i32_0 = arith.constant 0 : i32
    %c0_i32_1 = arith.constant 0 : i32
    return %c0_i32, %c0_i32_0 : i32, i32
  }
}

</mosaic_0001>

<llo_original>
// kernel: decoder_rnn_forward.1
$region0: #{decoder_rnn_forward.1}
  #allocation0 [shape = 'u32[]', space=smem, size = 0x4, offset = 0x4, fixed_abs, tag = 'smem constant byte address 0x4 - core index']
  #allocation1 [shape = 'u32[144,128]{1,0:T(1,128)}', space=vmem, size = 0x12000, scoped, tag = 'internal scratch']
  #allocation2 [shape = 'f32[64,512]{1,0:T(8,128)}', space=vmem, size = 0x20000, scoped, tag = 'scratch operand']
  #allocation3 [shape = 'f32[64,128]{1,0:T(8,128)}', space=vmem, size = 0x8000, scoped, tag = 'scratch operand']
  %s0 = inlined_call_operand.vmem [shape: f32[64,128], index: 0, kind: input, shape index: {}]
  %s1 = inlined_call_operand.hbm [shape: f32[128,512], index: 1, kind: input, shape index: {}]
  %s2 = inlined_call_operand.hbm [shape: f32[128,512], index: 2, kind: input, shape index: {}]
  %s3 = inlined_call_operand.vmem [shape: f32[1,512], index: 3, kind: input, shape index: {}]
  %s4 = inlined_call_operand.vmem [shape: f32[128,128], index: 4, kind: input, shape index: {}]
  %s5 = inlined_call_operand.vmem [shape: f32[1,128], index: 5, kind: input, shape index: {}]
  %s6 = inlined_call_operand.vmem [shape: f32[64,128], index: 6, kind: output, shape index: {}]
  %s7 = sld [smem:[#allocation0]]
  $region42: #{decoder_rnn_forward.1} parent=0
    _
  %s9 = ssub.s32 1, %s7
  %s10 = scalar_select 0, %s9, %s7
  $region1: #{decoder_rnn_forward.1} parent=0
    #allocation4 [shape = 'u8[262144]{0}', space=vmem, size = 0x40000, scoped, tag = 'input window, operand 1, single buffered']
    #allocation5 [shape = 's32[1]{0}', space=sflag, size = 0x4, scoped, tag = 'scoped memory for decoder_rnn_forward.1']
    #allocation6 [shape = 'u8[262144]{0}', space=vmem, size = 0x40000, scoped, tag = 'input window, operand 2, single buffered']
    #allocation7 [shape = 's32[1]{0}', space=sflag, size = 0x4, scoped, tag = 'scoped memory for decoder_rnn_forward.1']
    %11 = vsyncpa [#allocation5], 0
    %12 = vsyncpa [#allocation7], 0
    // Predicated region
    $region2: #{decoder_rnn_forward.1} parent=1 // pred_check
      _
    $region3: #{decoder_rnn_forward.1} parent=1 // pred_check_branch
      %14 = sbr.rel (0) target = $region5
    $region4: #{decoder_rnn_forward.1} parent=1 // pred_region
      _
    $region5: #{decoder_rnn_forward.1} parent=1 // pred_fallthru
      _
    // Predicated region
    $region6: #{decoder_rnn_forward.1} parent=1 // pred_check
      _
    $region7: #{decoder_rnn_forward.1} parent=1 // pred_check_branch
      %16 = sbr.rel (0) target = $region9
    $region8: #{decoder_rnn_forward.1} parent=1 // pred_region
      %s18 = ssub.s32 8192, 8192
      %19 = vsyncadd [#allocation5], %s18
      %s20 = sshll.u32 [#allocation4], 4
      %s21 = int_to_ptr.vmem [resolvable:$true] %s20
      %26 = dma.hbm_to_vmem [thread:$0]  %s1, 8192, %s21, [#allocation5], 512, 512, 32
    $region9: #{decoder_rnn_forward.1} parent=1 // pred_fallthru
      _
    // Predicated region
    $region10: #{decoder_rnn_forward.1} parent=1 // pred_check
      _
    $region11: #{decoder_rnn_forward.1} parent=1 // pred_check_branch
      %28 = sbr.rel (0) target = $region13
    $region12: #{decoder_rnn_forward.1} parent=1 // pred_region
      %s30 = ssub.s32 8192, 8192
      %31 = vsyncadd [#allocation7], %s30
      %s32 = sshll.u32 [#allocation6], 4
      %s33 = int_to_ptr.vmem [resolvable:$true] %s32
      %38 = dma.hbm_to_vmem [thread:$0]  %s2, 8192, %s33, [#allocation7], 512, 512, 32
    $region13: #{decoder_rnn_forward.1} parent=1 // pred_fallthru
      _
    // Predicated region
    $region14: #{decoder_rnn_forward.1} parent=1 // pred_check
      _
    $region15: #{decoder_rnn_forward.1} parent=1 // pred_check_branch
      %40 = sbr.rel (0) target = $region17
    $region16: #{decoder_rnn_forward.1} parent=1 // pred_region
      _
    $region17: #{decoder_rnn_forward.1} parent=1 // pred_fallthru
      _
    // Predicated region
    $region18: #{decoder_rnn_forward.1} parent=1 // pred_check
      _
    $region19: #{decoder_rnn_forward.1} parent=1 // pred_check_branch
      %42 = sbr.rel (0) target = $region21
    $region20: #{decoder_rnn_forward.1} parent=1 // pred_region
      _
    $region21: #{decoder_rnn_forward.1} parent=1 // pred_fallthru
      _
    // Predicated region
    $region22: #{decoder_rnn_forward.1} parent=1 // pred_check
      _
    $region23: #{decoder_rnn_forward.1} parent=1 // pred_check_branch
      %44 = sbr.rel (0) target = $region25
    $region24: #{decoder_rnn_forward.1} parent=1 // pred_region
      _
    $region25: #{decoder_rnn_forward.1} parent=1 // pred_fallthru
      _
    // Predicated region
    $region26: #{decoder_rnn_forward.1} parent=1 // pred_check
      _
    $region27: #{decoder_rnn_forward.1} parent=1 // pred_check_branch
      %46 = sbr.rel (0) target = $region29
    $region28: #{decoder_rnn_forward.1} parent=1 // pred_region
      %47 = dma.done [#allocation5], 8192
    $region29: #{decoder_rnn_forward.1} parent=1 // pred_fallthru
      _
    // Predicated region
    $region30: #{decoder_rnn_forward.1} parent=1 // pred_check
      _
    $region31: #{decoder_rnn_forward.1} parent=1 // pred_check_branch
      %49 = sbr.rel (0) target = $region33
    $region32: #{decoder_rnn_forward.1} parent=1 // pred_region
      %50 = dma.done [#allocation7], 8192
    $region33: #{decoder_rnn_forward.1} parent=1 // pred_fallthru
      _
    %v51 = vld [vmem:[%s0] sm:$0xff]
    %v52 = vld [vmem:[%s0 + $0x8] sm:$0xff]
    %v53 = vld [vmem:[%s0 + $0x10] sm:$0xff]
    %v54 = vld [vmem:[%s0 + $0x18] sm:$0xff]
    %v55 = vld [vmem:[%s0 + $0x20] sm:$0xff]
    %v56 = vld [vmem:[%s0 + $0x28] sm:$0xff]
    %v57 = vld [vmem:[%s0 + $0x30] sm:$0xff]
    %v58 = vld [vmem:[%s0 + $0x38] sm:$0xff]
    %v59 = vld [vmem:[#allocation4] sm:$0xff]
    %v60 = vld [vmem:[#allocation4 + $0x8] sm:$0xff]
    %v61 = vld [vmem:[#allocation4 + $0x10] sm:$0xff]
    %v62 = vld [vmem:[#allocation4 + $0x18] sm:$0xff]
    %v63 = vld [vmem:[#allocation4 + $0x20] sm:$0xff]
    %v64 = vld [vmem:[#allocation4 + $0x28] sm:$0xff]
    %v65 = vld [vmem:[#allocation4 + $0x30] sm:$0xff]
    %v66 = vld [vmem:[#allocation4 + $0x38] sm:$0xff]
    %v67 = vld [vmem:[#allocation4 + $0x40] sm:$0xff]
    %v68 = vld [vmem:[#allocation4 + $0x48] sm:$0xff]
    %v69 = vld [vmem:[#allocation4 + $0x50] sm:$0xff]
    %v70 = vld [vmem:[#allocation4 + $0x58] sm:$0xff]
    %v71 = vld [vmem:[#allocation4 + $0x60] sm:$0xff]
    %v72 = vld [vmem:[#allocation4 + $0x68] sm:$0xff]
    %v73 = vld [vmem:[#allocation4 + $0x70] sm:$0xff]
    %v74 = vld [vmem:[#allocation4 + $0x78] sm:$0xff]
    %v75 = vld [vmem:[#allocation4 + $0x80] sm:$0xff]
    %v76 = vld [vmem:[#allocation4 + $0x88] sm:$0xff]
    %v77 = vld [vmem:[#allocation4 + $0x90] sm:$0xff]
    %v78 = vld [vmem:[#allocation4 + $0x98] sm:$0xff]
    %v79 = vld [vmem:[#allocation4 + $0xa0] sm:$0xff]
    %v80 = vld [vmem:[#allocation4 + $0xa8] sm:$0xff]
    %v81 = vld [vmem:[#allocation4 + $0xb0] sm:$0xff]
    %v82 = vld [vmem:[#allocation4 + $0xb8] sm:$0xff]
    %v83 = vld [vmem:[#allocation4 + $0xc0] sm:$0xff]
    %v84 = vld [vmem:[#allocation4 + $0xc8] sm:$0xff]
    %v85 = vld [vmem:[#allocation4 + $0xd0] sm:$0xff]
    %v86 = vld [vmem:[#allocation4 + $0xd8] sm:$0xff]
    %v87 = vld [vmem:[#allocation4 + $0xe0] sm:$0xff]
    %v88 = vld [vmem:[#allocation4 + $0xe8] sm:$0xff]
    %v89 = vld [vmem:[#allocation4 + $0xf0] sm:$0xff]
    %v90 = vld [vmem:[#allocation4 + $0xf8] sm:$0xff]
    %v91 = vld [vmem:[#allocation4 + $0x100] sm:$0xff]
    %v92 = vld [vmem:[#allocation4 + $0x108] sm:$0xff]
    %v93 = vld [vmem:[#allocation4 + $0x110] sm:$0xff]
    %v94 = vld [vmem:[#allocation4 + $0x118] sm:$0xff]
    %v95 = vld [vmem:[#allocation4 + $0x120] sm:$0xff]
    %v96 = vld [vmem:[#allocation4 + $0x128] sm:$0xff]
    %v97 = vld [vmem:[#allocation4 + $0x130] sm:$0xff]
    %v98 = vld [vmem:[#allocation4 + $0x138] sm:$0xff]
    %v99 = vld [vmem:[#allocation4 + $0x140] sm:$0xff]
    %v100 = vld [vmem:[#allocation4 + $0x148] sm:$0xff]
    %v101 = vld [vmem:[#allocation4 + $0x150] sm:$0xff]
    %v102 = vld [vmem:[#allocation4 + $0x158] sm:$0xff]
    %v103 = vld [vmem:[#allocation4 + $0x160] sm:$0xff]
    %v104 = vld [vmem:[#allocation4 + $0x168] sm:$0xff]
    %v105 = vld [vmem:[#allocation4 + $0x170] sm:$0xff]
    %v106 = vld [vmem:[#allocation4 + $0x178] sm:$0xff]
    %v107 = vld [vmem:[#allocation4 + $0x180] sm:$0xff]
    %v108 = vld [vmem:[#allocation4 + $0x188] sm:$0xff]
    %v109 = vld [vmem:[#allocation4 + $0x190] sm:$0xff]
    %v110 = vld [vmem:[#allocation4 + $0x198] sm:$0xff]
    %v111 = vld [vmem:[#allocation4 + $0x1a0] sm:$0xff]
    %v112 = vld [vmem:[#allocation4 + $0x1a8] sm:$0xff]
    %v113 = vld [vmem:[#allocation4 + $0x1b0] sm:$0xff]
    %v114 = vld [vmem:[#allocation4 + $0x1b8] sm:$0xff]
    %v115 = vld [vmem:[#allocation4 + $0x1c0] sm:$0xff]
    %v116 = vld [vmem:[#allocation4 + $0x1c8] sm:$0xff]
    %v117 = vld [vmem:[#allocation4 + $0x1d0] sm:$0xff]
    %v118 = vld [vmem:[#allocation4 + $0x1d8] sm:$0xff]
    %v119 = vld [vmem:[#allocation4 + $0x1e0] sm:$0xff]
    %v120 = vld [vmem:[#allocation4 + $0x1e8] sm:$0xff]
    %v121 = vld [vmem:[#allocation4 + $0x1f0] sm:$0xff]
    %v122 = vld [vmem:[#allocation4 + $0x1f8] sm:$0xff]
    %v123 = vld [vmem:[%s3] sm:$0xf]
    %v125 = vlaneseq
    %v126 = vshrl.u32 %v125, 7
    %v127 = vsub.s32 0, %v126
    %v128 = vrot.slane %v123, %v127
    %v129 = vlaneseq
    %v130 = vshrl.u32 %v129, 7
    %v131 = vsub.s32 1, %v130
    %v132 = vrot.slane %v123, %v131
    %v133 = vlaneseq
    %v134 = vshrl.u32 %v133, 7
    %v135 = vsub.s32 2, %v134
    %v136 = vrot.slane %v123, %v135
    %v137 = vlaneseq
    %v138 = vshrl.u32 %v137, 7
    %v139 = vsub.s32 3, %v138
    %v140 = vrot.slane %v123, %v139
    %145 = vmatprep.subr.mxu0 %v60
    %146 = vmatpush1.msra.mxu0 %v59
    %147 = vmatprep.subr.mxu0 %v64
    %148 = vmatpush1.msra.mxu0 %v63
    %149 = vmatprep.subr.mxu0 %v68
    %150 = vmatpush1.msra.mxu0 %v67
    %151 = vmatprep.subr.mxu0 %v72
    %152 = vmatpush1.msra.mxu0 %v71
    %153 = vmatprep.subr.mxu0 %v76
    %154 = vmatpush1.msra.mxu0 %v75
    %155 = vmatprep.subr.mxu0 %v80
    %156 = vmatpush1.msra.mxu0 %v79
    %157 = vmatprep.subr.mxu0 %v84
    %158 = vmatpush1.msra.mxu0 %v83
    %159 = vmatprep.subr.mxu0 %v88
    %160 = vmatpush1.msra.mxu0 %v87
    %161 = vmatprep.subr.mxu0 %v92
    %162 = vmatpush1.msra.mxu0 %v91
    %163 = vmatprep.subr.mxu0 %v96
    %164 = vmatpush1.msra.mxu0 %v95
    %165 = vmatprep.subr.mxu0 %v100
    %166 = vmatpush1.msra.mxu0 %v99
    %167 = vmatprep.subr.mxu0 %v104
    %168 = vmatpush1.msra.mxu0 %v103
    %169 = vmatprep.subr.mxu0 %v108
    %170 = vmatpush1.msra.mxu0 %v107
    %171 = vmatprep.subr.mxu0 %v112
    %172 = vmatpush1.msra.mxu0 %v111
    %173 = vmatprep.subr.mxu0 %v116
    %174 = vmatpush1.msra.mxu0 %v115
    %175 = vmatprep.subr.mxu0 %v120
    %176 = vmatpush1.msra.mxu0 %v119
    %177 = vmatprep.subr.mxu0 0.0
    %178 = vmatpush1.msra.mxu0 0.0
    %179 = vmatprep.subr.mxu0 0.0
    %180 = vmatpush1.msra.mxu0 0.0
    %181 = vmatprep.subr.mxu0 0.0
    %182 = vmatpush1.msra.mxu0 0.0
    %183 = vmatprep.subr.mxu0 0.0
    %184 = vmatpush1.msra.mxu0 0.0
    %185 = vmatprep.subr.mxu0 0.0
    %186 = vmatpush1.msra.mxu0 0.0
    %187 = vmatprep.subr.mxu0 0.0
    %188 = vmatpush1.msra.mxu0 0.0
    %189 = vmatprep.subr.mxu0 0.0
    %190 = vmatpush1.msra.mxu0 0.0
    %191 = vmatprep.subr.mxu0 0.0
    %192 = vmatpush1.msra.mxu0 0.0
    %193 = vmatprep.subr.mxu0 0.0
    %194 = vmatpush1.msra.mxu0 0.0
    %195 = vmatprep.subr.mxu0 0.0
    %196 = vmatpush1.msra.mxu0 0.0
    %197 = vmatprep.subr.mxu0 0.0
    %198 = vmatpush1.msra.mxu0 0.0
    %199 = vmatprep.subr.mxu0 0.0
    %200 = vmatpush1.msra.mxu0 0.0
    %201 = vmatprep.subr.mxu0 0.0
    %202 = vmatpush1.msra.mxu0 0.0
    %203 = vmatprep.subr.mxu0 0.0
    %204 = vmatpush1.msra.mxu0 0.0
    %205 = vmatprep.subr.mxu0 0.0
    %206 = vmatpush1.msra.mxu0 0.0
    %207 = vmatprep.subr.mxu0 0.0
    %208 = vmatpush1.msra.mxu0 0.0
    %209 = vmatprep.mubr.f32.mxu0 0.0
    %210 = vmatmul.mubr.f32.gmra.mrb[0].mxu0 %v51
    %v211 = vpop.f32.mrb[0].mxu0
    %v212 = vadd.f32 %v128, %v211
    %v213 = vpop.f32.mrb[0].mxu0
    %v214 = vadd.f32 %v132, %v213
    %215 = vmatprep.mubr.f32.mxu0 0.0
    %216 = vmatmul.mubr.f32.gmra.mrb[0].mxu0 %v52
    %v217 = vpop.f32.mrb[0].mxu0
    %v218 = vadd.f32 %v128, %v217
    %v219 = vpop.f32.mrb[0].mxu0
    %v220 = vadd.f32 %v132, %v219
    %221 = vmatprep.mubr.f32.mxu0 0.0
    %222 = vmatmul.mubr.f32.gmra.mrb[0].mxu0 %v53
    %v223 = vpop.f32.mrb[0].mxu0
    %v224 = vadd.f32 %v128, %v223
    %v225 = vpop.f32.mrb[0].mxu0
    %v226 = vadd.f32 %v132, %v225
    %227 = vmatprep.mubr.f32.mxu0 0.0
    %228 = vmatmul.mubr.f32.gmra.mrb[0].mxu0 %v54
    %v229 = vpop.f32.mrb[0].mxu0
    %v230 = vadd.f32 %v128, %v229
    %v231 = vpop.f32.mrb[0].mxu0
    %v232 = vadd.f32 %v132, %v231
    %233 = vmatprep.mubr.f32.mxu0 0.0
    %234 = vmatmul.mubr.f32.gmra.mrb[0].mxu0 %v55
    %v235 = vpop.f32.mrb[0].mxu0
    %v236 = vadd.f32 %v128, %v235
    %v237 = vpop.f32.mrb[0].mxu0
    %v238 = vadd.f32 %v132, %v237
    %239 = vmatprep.mubr.f32.mxu0 0.0
    %240 = vmatmul.mubr.f32.gmra.mrb[0].mxu0 %v56
    %v241 = vpop.f32.mrb[0].mxu0
    %v242 = vadd.f32 %v128, %v241
    %v243 = vpop.f32.mrb[0].mxu0
    %v244 = vadd.f32 %v132, %v243
    %245 = vmatprep.mubr.f32.mxu0 0.0
    %246 = vmatmul.mubr.f32.gmra.mrb[0].mxu0 %v57
    %v247 = vpop.f32.mrb[0].mxu0
    %v248 = vadd.f32 %v128, %v247
    %v249 = vpop.f32.mrb[0].mxu0
    %v250 = vadd.f32 %v132, %v249
    %251 = vmatprep.mubr.f32.mxu0 0.0
    %252 = vmatmul.mubr.f32.gmra.mrb[0].mxu0 %v58
    %v253 = vpop.f32.mrb[0].mxu0
    %v254 = vadd.f32 %v128, %v253
    %v255 = vpop.f32.mrb[0].mxu0
    %v256 = vadd.f32 %v132, %v255
    %257 = vdwg.mxu0
    %258 = vmatprep.subr.mxu0 %v62
    %259 = vmatpush1.msra.mxu0 %v61
    %260 = vmatprep.subr.mxu0 %v66
    %261 = vmatpush1.msra.mxu0 %v65
    %262 = vmatprep.subr.mxu0 %v70
    %263 = vmatpush1.msra.mxu0 %v69
    %264 = vmatprep.subr.mxu0 %v74
    %265 = vmatpush1.msra.mxu0 %v73
    %266 = vmatprep.subr.mxu0 %v78
    %267 = vmatpush1.msra.mxu0 %v77
    %268 = vmatprep.subr.mxu0 %v82
    %269 = vmatpush1.msra.mxu0 %v81
    %270 = vmatprep.subr.mxu0 %v86
    %271 = vmatpush1.msra.mxu0 %v85
    %272 = vmatprep.subr.mxu0 %v90
    %273 = vmatpush1.msra.mxu0 %v89
    %274 = vmatprep.subr.mxu0 %v94
    %275 = vmatpush1.msra.mxu0 %v93
    %276 = vmatprep.subr.mxu0 %v98
    %277 = vmatpush1.msra.mxu0 %v97
    %278 = vmatprep.subr.mxu0 %v102
    %279 = vmatpush1.msra.mxu0 %v101
    %280 = vmatprep.subr.mxu0 %v106
    %281 = vmatpush1.msra.mxu0 %v105
    %282 = vmatprep.subr.mxu0 %v110
    %283 = vmatpush1.msra.mxu0 %v109
    %284 = vmatprep.subr.mxu0 %v114
    %285 = vmatpush1.msra.mxu0 %v113
    %286 = vmatprep.subr.mxu0 %v118
    %287 = vmatpush1.msra.mxu0 %v117
    %288 = vmatprep.subr.mxu0 %v122
    %289 = vmatpush1.msra.mxu0 %v121
    %290 = vmatprep.subr.mxu0 0.0
    %291 = vmatpush1.msra.mxu0 0.0
    %292 = vmatprep.subr.mxu0 0.0
    %293 = vmatpush1.msra.mxu0 0.0
    %294 = vmatprep.subr.mxu0 0.0
    %295 = vmatpush1.msra.mxu0 0.0
    %296 = vmatprep.subr.mxu0 0.0
    %297 = vmatpush1.msra.mxu0 0.0
    %298 = vmatprep.subr.mxu0 0.0
    %299 = vmatpush1.msra.mxu0 0.0
    %300 = vmatprep.subr.mxu0 0.0
    %301 = vmatpush1.msra.mxu0 0.0
    %302 = vmatprep.subr.mxu0 0.0
    %303 = vmatpush1.msra.mxu0 0.0
    %304 = vmatprep.subr.mxu0 0.0
    %305 = vmatpush1.msra.mxu0 0.0
    %306 = vmatprep.subr.mxu0 0.0
    %307 = vmatpush1.msra.mxu0 0.0
    %308 = vmatprep.subr.mxu0 0.0
    %309 = vmatpush1.msra.mxu0 0.0
    %310 = vmatprep.subr.mxu0 0.0
    %311 = vmatpush1.msra.mxu0 0.0
    %312 = vmatprep.subr.mxu0 0.0
    %313 = vmatpush1.msra.mxu0 0.0
    %314 = vmatprep.subr.mxu0 0.0
    %315 = vmatpush1.msra.mxu0 0.0
    %316 = vmatprep.subr.mxu0 0.0
    %317 = vmatpush1.msra.mxu0 0.0
    %318 = vmatprep.subr.mxu0 0.0
    %319 = vmatpush1.msra.mxu0 0.0
    %320 = vmatprep.subr.mxu0 0.0
    %321 = vmatpush1.msra.mxu0 0.0
    %322 = vmatprep.mubr.f32.mxu0 0.0
    %323 = vmatmul.mubr.f32.gmra.mrb[0].mxu0 %v51
    %v324 = vpop.f32.mrb[0].mxu0
    %v325 = vadd.f32 %v136, %v324
    %v326 = vpop.f32.mrb[0].mxu0
    %v327 = vadd.f32 %v140, %v326
    %328 = vmatprep.mubr.f32.mxu0 0.0
    %329 = vmatmul.mubr.f32.gmra.mrb[0].mxu0 %v52
    %v330 = vpop.f32.mrb[0].mxu0
    %v331 = vadd.f32 %v136, %v330
    %v332 = vpop.f32.mrb[0].mxu0
    %v333 = vadd.f32 %v140, %v332
    %334 = vmatprep.mubr.f32.mxu0 0.0
    %335 = vmatmul.mubr.f32.gmra.mrb[0].mxu0 %v53
    %v336 = vpop.f32.mrb[0].mxu0
    %v337 = vadd.f32 %v136, %v336
    %v338 = vpop.f32.mrb[0].mxu0
    %v339 = vadd.f32 %v140, %v338
    %340 = vmatprep.mubr.f32.mxu0 0.0
    %341 = vmatmul.mubr.f32.gmra.mrb[0].mxu0 %v54
    %v342 = vpop.f32.mrb[0].mxu0
    %v343 = vadd.f32 %v136, %v342
    %v344 = vpop.f32.mrb[0].mxu0
    %v345 = vadd.f32 %v140, %v344
    %346 = vmatprep.mubr.f32.mxu0 0.0
    %347 = vmatmul.mubr.f32.gmra.mrb[0].mxu0 %v55
    %v348 = vpop.f32.mrb[0].mxu0
    %v349 = vadd.f32 %v136, %v348
    %v350 = vpop.f32.mrb[0].mxu0
    %v351 = vadd.f32 %v140, %v350
    %352 = vmatprep.mubr.f32.mxu0 0.0
    %353 = vmatmul.mubr.f32.gmra.mrb[0].mxu0 %v56
    %v354 = vpop.f32.mrb[0].mxu0
    %v355 = vadd.f32 %v136, %v354
    %v356 = vpop.f32.mrb[0].mxu0
    %v357 = vadd.f32 %v140, %v356
    %358 = vmatprep.mubr.f32.mxu0 0.0
    %359 = vmatmul.mubr.f32.gmra.mrb[0].mxu0 %v57
    %v360 = vpop.f32.mrb[0].mxu0
    %v361 = vadd.f32 %v136, %v360
    %v362 = vpop.f32.mrb[0].mxu0
    %v363 = vadd.f32 %v140, %v362
    %364 = vmatprep.mubr.f32.mxu0 0.0
    %365 = vmatmul.mubr.f32.gmra.mrb[0].mxu0 %v58
    %v366 = vpop.f32.mrb[0].mxu0
    %v367 = vadd.f32 %v136, %v366
    %v368 = vpop.f32.mrb[0].mxu0
    %v369 = vadd.f32 %v140, %v368
    %370 = vdwg.mxu0
    %371 = vst [vmem:[#allocation2] sm:$0xff] %v212
    %372 = vst [vmem:[#allocation2 + $0x8] sm:$0xff] %v214
    %373 = vst [vmem:[#allocation2 + $0x10] sm:$0xff] %v325
    %374 = vst [vmem:[#allocation2 + $0x18] sm:$0xff] %v327
    %375 = vst [vmem:[#allocation2 + $0x20] sm:$0xff] %v218
    %376 = vst [vmem:[#allocation2 + $0x28] sm:$0xff] %v220
    %377 = vst [vmem:[#allocation2 + $0x30] sm:$0xff] %v331
    %378 = vst [vmem:[#allocation2 + $0x38] sm:$0xff] %v333
    %379 = vst [vmem:[#allocation2 + $0x40] sm:$0xff] %v224
    %380 = vst [vmem:[#allocation2 + $0x48] sm:$0xff] %v226
    %381 = vst [vmem:[#allocation2 + $0x50] sm:$0xff] %v337
    %382 = vst [vmem:[#allocation2 + $0x58] sm:$0xff] %v339
    %383 = vst [vmem:[#allocation2 + $0x60] sm:$0xff] %v230
    %384 = vst [vmem:[#allocation2 + $0x68] sm:$0xff] %v232
    %385 = vst [vmem:[#allocation2 + $0x70] sm:$0xff] %v343
    %386 = vst [vmem:[#allocation2 + $0x78] sm:$0xff] %v345
    %387 = vst [vmem:[#allocation2 + $0x80] sm:$0xff] %v236
    %388 = vst [vmem:[#allocation2 + $0x88] sm:$0xff] %v238
    %389 = vst [vmem:[#allocation2 + $0x90] sm:$0xff] %v349
    %390 = vst [vmem:[#allocation2 + $0x98] sm:$0xff] %v351
    %391 = vst [vmem:[#allocation2 + $0xa0] sm:$0xff] %v242
    %392 = vst [vmem:[#allocation2 + $0xa8] sm:$0xff] %v244
    %393 = vst [vmem:[#allocation2 + $0xb0] sm:$0xff] %v355
    %394 = vst [vmem:[#allocation2 + $0xb8] sm:$0xff] %v357
    %395 = vst [vmem:[#allocation2 + $0xc0] sm:$0xff] %v248
    %396 = vst [vmem:[#allocation2 + $0xc8] sm:$0xff] %v250
    %397 = vst [vmem:[#allocation2 + $0xd0] sm:$0xff] %v361
    %398 = vst [vmem:[#allocation2 + $0xd8] sm:$0xff] %v363
    %399 = vst [vmem:[#allocation2 + $0xe0] sm:$0xff] %v254
    %400 = vst [vmem:[#allocation2 + $0xe8] sm:$0xff] %v256
    %401 = vst [vmem:[#allocation2 + $0xf0] sm:$0xff] %v367
    %402 = vst [vmem:[#allocation2 + $0xf8] sm:$0xff] %v369
    %v403 = vld [vmem:[#allocation6] sm:$0xff]
    %v404 = vld [vmem:[#allocation6 + $0x8] sm:$0xff]
    %v405 = vld [vmem:[#allocation6 + $0x10] sm:$0xff]
    %v406 = vld [vmem:[#allocation6 + $0x18] sm:$0xff]
    %v407 = vld [vmem:[#allocation6 + $0x20] sm:$0xff]
    %v408 = vld [vmem:[#allocation6 + $0x28] sm:$0xff]
    %v409 = vld [vmem:[#allocation6 + $0x30] sm:$0xff]
    %v410 = vld [vmem:[#allocation6 + $0x38] sm:$0xff]
    %v411 = vld [vmem:[#allocation6 + $0x40] sm:$0xff]
    %v412 = vld [vmem:[#allocation6 + $0x48] sm:$0xff]
    %v413 = vld [vmem:[#allocation6 + $0x50] sm:$0xff]
    %v414 = vld [vmem:[#allocation6 + $0x58] sm:$0xff]
    %v415 = vld [vmem:[#allocation6 + $0x60] sm:$0xff]
    %v416 = vld [vmem:[#allocation6 + $0x68] sm:$0xff]
    %v417 = vld [vmem:[#allocation6 + $0x70] sm:$0xff]
    %v418 = vld [vmem:[#allocation6 + $0x78] sm:$0xff]
    %v419 = vld [vmem:[#allocation6 + $0x80] sm:$0xff]
    %v420 = vld [vmem:[#allocation6 + $0x88] sm:$0xff]
    %v421 = vld [vmem:[#allocation6 + $0x90] sm:$0xff]
    %v422 = vld [vmem:[#allocation6 + $0x98] sm:$0xff]
    %v423 = vld [vmem:[#allocation6 + $0xa0] sm:$0xff]
    %v424 = vld [vmem:[#allocation6 + $0xa8] sm:$0xff]
    %v425 = vld [vmem:[#allocation6 + $0xb0] sm:$0xff]
    %v426 = vld [vmem:[#allocation6 + $0xb8] sm:$0xff]
    %v427 = vld [vmem:[#allocation6 + $0xc0] sm:$0xff]
    %v428 = vld [vmem:[#allocation6 + $0xc8] sm:$0xff]
    %v429 = vld [vmem:[#allocation6 + $0xd0] sm:$0xff]
    %v430 = vld [vmem:[#allocation6 + $0xd8] sm:$0xff]
    %v431 = vld [vmem:[#allocation6 + $0xe0] sm:$0xff]
    %v432 = vld [vmem:[#allocation6 + $0xe8] sm:$0xff]
    %v433 = vld [vmem:[#allocation6 + $0xf0] sm:$0xff]
    %v434 = vld [vmem:[#allocation6 + $0xf8] sm:$0xff]
    %v435 = vld [vmem:[#allocation6 + $0x100] sm:$0xff]
    %v436 = vld [vmem:[#allocation6 + $0x108] sm:$0xff]
    %v437 = vld [vmem:[#allocation6 + $0x110] sm:$0xff]
    %v438 = vld [vmem:[#allocation6 + $0x118] sm:$0xff]
    %v439 = vld [vmem:[#allocation6 + $0x120] sm:$0xff]
    %v440 = vld [vmem:[#allocation6 + $0x128] sm:$0xff]
    %v441 = vld [vmem:[#allocation6 + $0x130] sm:$0xff]
    %v442 = vld [vmem:[#allocation6 + $0x138] sm:$0xff]
    %v443 = vld [vmem:[#allocation6 + $0x140] sm:$0xff]
    %v444 = vld [vmem:[#allocation6 + $0x148] sm:$0xff]
    %v445 = vld [vmem:[#allocation6 + $0x150] sm:$0xff]
    %v446 = vld [vmem:[#allocation6 + $0x158] sm:$0xff]
    %v447 = vld [vmem:[#allocation6 + $0x160] sm:$0xff]
    %v448 = vld [vmem:[#allocation6 + $0x168] sm:$0xff]
    %v449 = vld [vmem:[#allocation6 + $0x170] sm:$0xff]
    %v450 = vld [vmem:[#allocation6 + $0x178] sm:$0xff]
    %v451 = vld [vmem:[#allocation6 + $0x180] sm:$0xff]
    %v452 = vld [vmem:[#allocation6 + $0x188] sm:$0xff]
    %v453 = vld [vmem:[#allocation6 + $0x190] sm:$0xff]
    %v454 = vld [vmem:[#allocation6 + $0x198] sm:$0xff]
    %v455 = vld [vmem:[#allocation6 + $0x1a0] sm:$0xff]
    %v456 = vld [vmem:[#allocation6 + $0x1a8] sm:$0xff]
    %v457 = vld [vmem:[#allocation6 + $0x1b0] sm:$0xff]
    %v458 = vld [vmem:[#allocation6 + $0x1b8] sm:$0xff]
    %v459 = vld [vmem:[#allocation6 + $0x1c0] sm:$0xff]
    %v460 = vld [vmem:[#allocation6 + $0x1c8] sm:$0xff]
    %v461 = vld [vmem:[#allocation6 + $0x1d0] sm:$0xff]
    %v462 = vld [vmem:[#allocation6 + $0x1d8] sm:$0xff]
    %v463 = vld [vmem:[#allocation6 + $0x1e0] sm:$0xff]
    %v464 = vld [vmem:[#allocation6 + $0x1e8] sm:$0xff]
    %v465 = vld [vmem:[#allocation6 + $0x1f0] sm:$0xff]
    %v466 = vld [vmem:[#allocation6 + $0x1f8] sm:$0xff]
    %v467 = vld [vmem:[#allocation2] sm:$0xff]
    %v468 = vld [vmem:[#allocation2 + $0x8] sm:$0xff]
    %v469 = vld [vmem:[#allocation2 + $0x10] sm:$0xff]
    %v470 = vld [vmem:[#allocation2 + $0x18] sm:$0xff]
    %471 = vmatprep.subr.mxu0 %v404
    %472 = vmatpush1.msra.mxu0 %v403
    %473 = vmatprep.subr.mxu0 %v408
    %474 = vmatpush1.msra.mxu0 %v407
    %475 = vmatprep.subr.mxu0 %v412
    %476 = vmatpush1.msra.mxu0 %v411
    %477 = vmatprep.subr.mxu0 %v416
    %478 = vmatpush1.msra.mxu0 %v415
    %479 = vmatprep.subr.mxu0 %v420
    %480 = vmatpush1.msra.mxu0 %v419
    %481 = vmatprep.subr.mxu0 %v424
    %482 = vmatpush1.msra.mxu0 %v423
    %483 = vmatprep.subr.mxu0 %v428
    %484 = vmatpush1.msra.mxu0 %v427
    %485 = vmatprep.subr.mxu0 %v432
    %486 = vmatpush1.msra.mxu0 %v431
    %487 = vmatprep.subr.mxu0 %v436
    %488 = vmatpush1.msra.mxu0 %v435
    %489 = vmatprep.subr.mxu0 %v440
    %490 = vmatpush1.msra.mxu0 %v439
    %491 = vmatprep.subr.mxu0 %v444
    %492 = vmatpush1.msra.mxu0 %v443
    %493 = vmatprep.subr.mxu0 %v448
    %494 = vmatpush1.msra.mxu0 %v447
    %495 = vmatprep.subr.mxu0 %v452
    %496 = vmatpush1.msra.mxu0 %v451
    %497 = vmatprep.subr.mxu0 %v456
    %498 = vmatpush1.msra.mxu0 %v455
    %499 = vmatprep.subr.mxu0 %v460
    %500 = vmatpush1.msra.mxu0 %v459
    %501 = vmatprep.subr.mxu0 %v464
    %502 = vmatpush1.msra.mxu0 %v463
    %503 = vmatprep.subr.mxu0 0.0
    %504 = vmatpush1.msra.mxu0 0.0
    %505 = vmatprep.subr.mxu0 0.0
    %506 = vmatpush1.msra.mxu0 0.0
    %507 = vmatprep.subr.mxu0 0.0
    %508 = vmatpush1.msra.mxu0 0.0
    %509 = vmatprep.subr.mxu0 0.0
    %510 = vmatpush1.msra.mxu0 0.0
    %511 = vmatprep.subr.mxu0 0.0
    %512 = vmatpush1.msra.mxu0 0.0
    %513 = vmatprep.subr.mxu0 0.0
    %514 = vmatpush1.msra.mxu0 0.0
    %515 = vmatprep.subr.mxu0 0.0
    %516 = vmatpush1.msra.mxu0 0.0
    %517 = vmatprep.subr.mxu0 0.0
    %518 = vmatpush1.msra.mxu0 0.0
    %519 = vmatprep.subr.mxu0 0.0
    %520 = vmatpush1.msra.mxu0 0.0
    %521 = vmatprep.subr.mxu0 0.0
    %522 = vmatpush1.msra.mxu0 0.0
    %523 = vmatprep.subr.mxu0 0.0
    %524 = vmatpush1.msra.mxu0 0.0
    %525 = vmatprep.subr.mxu0 0.0
    %526 = vmatpush1.msra.mxu0 0.0
    %527 = vmatprep.subr.mxu0 0.0
    %528 = vmatpush1.msra.mxu0 0.0
    %529 = vmatprep.subr.mxu0 0.0
    %530 = vmatpush1.msra.mxu0 0.0
    %531 = vmatprep.subr.mxu0 0.0
    %532 = vmatpush1.msra.mxu0 0.0
    %533 = vmatprep.subr.mxu0 0.0
    %534 = vmatpush1.msra.mxu0 0.0
    %535 = vmatprep.mubr.f32.mxu0 0.0
    %536 = vmatmul.mubr.f32.gmra.mrb[0].mxu0 0.0
    %v537 = vpop.f32.mrb[0].mxu0
    %v538 = vadd.f32 0.0, %v537
    %v539 = vpop.f32.mrb[0].mxu0
    %v540 = vadd.f32 0.0, %v539
    %541 = vdwg.mxu0
    %542 = vmatprep.subr.mxu0 %v406
    %543 = vmatpush1.msra.mxu0 %v405
    %544 = vmatprep.subr.mxu0 %v410
    %545 = vmatpush1.msra.mxu0 %v409
    %546 = vmatprep.subr.mxu0 %v414
    %547 = vmatpush1.msra.mxu0 %v413
    %548 = vmatprep.subr.mxu0 %v418
    %549 = vmatpush1.msra.mxu0 %v417
    %550 = vmatprep.subr.mxu0 %v422
    %551 = vmatpush1.msra.mxu0 %v421
    %552 = vmatprep.subr.mxu0 %v426
    %553 = vmatpush1.msra.mxu0 %v425
    %554 = vmatprep.subr.mxu0 %v430
    %555 = vmatpush1.msra.mxu0 %v429
    %556 = vmatprep.subr.mxu0 %v434
    %557 = vmatpush1.msra.mxu0 %v433
    %558 = vmatprep.subr.mxu0 %v438
    %559 = vmatpush1.msra.mxu0 %v437
    %560 = vmatprep.subr.mxu0 %v442
    %561 = vmatpush1.msra.mxu0 %v441
    %562 = vmatprep.subr.mxu0 %v446
    %563 = vmatpush1.msra.mxu0 %v445
    %564 = vmatprep.subr.mxu0 %v450
    %565 = vmatpush1.msra.mxu0 %v449
    %566 = vmatprep.subr.mxu0 %v454
    %567 = vmatpush1.msra.mxu0 %v453
    %568 = vmatprep.subr.mxu0 %v458
    %569 = vmatpush1.msra.mxu0 %v457
    %570 = vmatprep.subr.mxu0 %v462
    %571 = vmatpush1.msra.mxu0 %v461
    %572 = vmatprep.subr.mxu0 %v466
    %573 = vmatpush1.msra.mxu0 %v465
    %574 = vmatprep.subr.mxu0 0.0
    %575 = vmatpush1.msra.mxu0 0.0
    %576 = vmatprep.subr.mxu0 0.0
    %577 = vmatpush1.msra.mxu0 0.0
    %578 = vmatprep.subr.mxu0 0.0
    %579 = vmatpush1.msra.mxu0 0.0
    %580 = vmatprep.subr.mxu0 0.0
    %581 = vmatpush1.msra.mxu0 0.0
    %582 = vmatprep.subr.mxu0 0.0
    %583 = vmatpush1.msra.mxu0 0.0
    %584 = vmatprep.subr.mxu0 0.0
    %585 = vmatpush1.msra.mxu0 0.0
    %586 = vmatprep.subr.mxu0 0.0
    %587 = vmatpush1.msra.mxu0 0.0
    %588 = vmatprep.subr.mxu0 0.0
    %589 = vmatpush1.msra.mxu0 0.0
    %590 = vmatprep.subr.mxu0 0.0
    %591 = vmatpush1.msra.mxu0 0.0
    %592 = vmatprep.subr.mxu0 0.0
    %593 = vmatpush1.msra.mxu0 0.0
    %594 = vmatprep.subr.mxu0 0.0
    %595 = vmatpush1.msra.mxu0 0.0
    %596 = vmatprep.subr.mxu0 0.0
    %597 = vmatpush1.msra.mxu0 0.0
    %598 = vmatprep.subr.mxu0 0.0
    %599 = vmatpush1.msra.mxu0 0.0
    %600 = vmatprep.subr.mxu0 0.0
    %601 = vmatpush1.msra.mxu0 0.0
    %602 = vmatprep.subr.mxu0 0.0
    %603 = vmatpush1.msra.mxu0 0.0
    %604 = vmatprep.subr.mxu0 0.0
    %605 = vmatpush1.msra.mxu0 0.0
    %606 = vmatprep.mubr.f32.mxu0 0.0
    %607 = vmatmul.mubr.f32.gmra.mrb[0].mxu0 0.0
    %v608 = vpop.f32.mrb[0].mxu0
    %v609 = vadd.f32 0.0, %v608
    %v610 = vpop.f32.mrb[0].mxu0
    %v611 = vadd.f32 0.0, %v610
    %612 = vdwg.mxu0
    %v613 = vadd.f32 %v467, %v538
    %v614 = vadd.f32 %v468, %v540
    %v615 = vadd.f32 %v469, %v609
    %v616 = vadd.f32 %v470, %v611
    %v617 = vxor.u32 %v613, 2147483648
    %v618 = vmul.f32 %v617, 1.442695
    %v619 = vpow.pop %v618
    %v620 = vadd.f32 %v619, 1.0
    %v621 = vrcp.pop %v620
    %v622 = vmul.f32 1.0, %v621
    %v623 = vxor.u32 %v614, 2147483648
    %v624 = vmul.f32 %v623, 1.442695
    %v625 = vpow.pop %v624
    %v626 = vadd.f32 %v625, 1.0
    %v627 = vrcp.pop %v626
    %v628 = vmul.f32 1.0, %v627
    %v629 = vtanh.pop %v615
    %v630 = vxor.u32 %v616, 2147483648
    %v631 = vmul.f32 %v630, 1.442695
    %v632 = vpow.pop %v631
    %v633 = vadd.f32 %v632, 1.0
    %v634 = vrcp.pop %v633
    %v635 = vmul.f32 1.0, %v634
    %v636 = vmul.f32 %v628, 0.0
    %v637 = vmul.f32 %v622, %v629
    %v638 = vadd.f32 %v636, %v637
    %v639 = vtanh.pop %v638
    %v640 = vmul.f32 %v635, %v639
    %641 = vst [vmem:[#allocation3] sm:$0xff] %v640
    %v642 = vld [vmem:[#allocation2 + $0x20] sm:$0xff]
    %v643 = vld [vmem:[#allocation2 + $0x28] sm:$0xff]
    %v644 = vld [vmem:[#allocation2 + $0x30] sm:$0xff]
    %v645 = vld [vmem:[#allocation2 + $0x38] sm:$0xff]
    %646 = vmatprep.subr.mxu0 %v404
    %647 = vmatpush1.msra.mxu0 %v403
    %648 = vmatprep.subr.mxu0 %v408
    %649 = vmatpush1.msra.mxu0 %v407
    %650 = vmatprep.subr.mxu0 %v412
    %651 = vmatpush1.msra.mxu0 %v411
    %652 = vmatprep.subr.mxu0 %v416
    %653 = vmatpush1.msra.mxu0 %v415
    %654 = vmatprep.subr.mxu0 %v420
    %655 = vmatpush1.msra.mxu0 %v419
    %656 = vmatprep.subr.mxu0 %v424
    %657 = vmatpush1.msra.mxu0 %v423
    %658 = vmatprep.subr.mxu0 %v428
    %659 = vmatpush1.msra.mxu0 %v427
    %660 = vmatprep.subr.mxu0 %v432
    %661 = vmatpush1.msra.mxu0 %v431
    %662 = vmatprep.subr.mxu0 %v436
    %663 = vmatpush1.msra.mxu0 %v435
    %664 = vmatprep.subr.mxu0 %v440
    %665 = vmatpush1.msra.mxu0 %v439
    %666 = vmatprep.subr.mxu0 %v444
    %667 = vmatpush1.msra.mxu0 %v443
    %668 = vmatprep.subr.mxu0 %v448
    %669 = vmatpush1.msra.mxu0 %v447
    %670 = vmatprep.subr.mxu0 %v452
    %671 = vmatpush1.msra.mxu0 %v451
    %672 = vmatprep.subr.mxu0 %v456
    %673 = vmatpush1.msra.mxu0 %v455
    %674 = vmatprep.subr.mxu0 %v460
    %675 = vmatpush1.msra.mxu0 %v459
    %676 = vmatprep.subr.mxu0 %v464
    %677 = vmatpush1.msra.mxu0 %v463
    %678 = vmatprep.subr.mxu0 0.0
    %679 = vmatpush1.msra.mxu0 0.0
    %680 = vmatprep.subr.mxu0 0.0
    %681 = vmatpush1.msra.mxu0 0.0
    %682 = vmatprep.subr.mxu0 0.0
    %683 = vmatpush1.msra.mxu0 0.0
    %684 = vmatprep.subr.mxu0 0.0
    %685 = vmatpush1.msra.mxu0 0.0
    %686 = vmatprep.subr.mxu0 0.0
    %687 = vmatpush1.msra.mxu0 0.0
    %688 = vmatprep.subr.mxu0 0.0
    %689 = vmatpush1.msra.mxu0 0.0
    %690 = vmatprep.subr.mxu0 0.0
    %691 = vmatpush1.msra.mxu0 0.0
    %692 = vmatprep.subr.mxu0 0.0
    %693 = vmatpush1.msra.mxu0 0.0
    %694 = vmatprep.subr.mxu0 0.0
    %695 = vmatpush1.msra.mxu0 0.0
    %696 = vmatprep.subr.mxu0 0.0
    %697 = vmatpush1.msra.mxu0 0.0
    %698 = vmatprep.subr.mxu0 0.0
    %699 = vmatpush1.msra.mxu0 0.0
    %700 = vmatprep.subr.mxu0 0.0
    %701 = vmatpush1.msra.mxu0 0.0
    %702 = vmatprep.subr.mxu0 0.0
    %703 = vmatpush1.msra.mxu0 0.0
    %704 = vmatprep.subr.mxu0 0.0
    %705 = vmatpush1.msra.mxu0 0.0
    %706 = vmatprep.subr.mxu0 0.0
    %707 = vmatpush1.msra.mxu0 0.0
    %708 = vmatprep.subr.mxu0 0.0
    %709 = vmatpush1.msra.mxu0 0.0
    %710 = vmatprep.mubr.f32.mxu0 0.0
    %711 = vmatmul.mubr.f32.gmra.mrb[0].mxu0 %v640
    %v712 = vpop.f32.mrb[0].mxu0
    %v713 = vadd.f32 0.0, %v712
    %v714 = vpop.f32.mrb[0].mxu0
    %v715 = vadd.f32 0.0, %v714
    %716 = vdwg.mxu0
    %717 = vmatprep.subr.mxu0 %v406
    %718 = vmatpush1.msra.mxu0 %v405
    %719 = vmatprep.subr.mxu0 %v410
    %720 = vmatpush1.msra.mxu0 %v409
    %721 = vmatprep.subr.mxu0 %v414
    %722 = vmatpush1.msra.mxu0 %v413
    %723 = vmatprep.subr.mxu0 %v418
    %724 = vmatpush1.msra.mxu0 %v417
    %725 = vmatprep.subr.mxu0 %v422
    %726 = vmatpush1.msra.mxu0 %v421
    %727 = vmatprep.subr.mxu0 %v426
    %728 = vmatpush1.msra.mxu0 %v425
    %729 = vmatprep.subr.mxu0 %v430
    %730 = vmatpush1.msra.mxu0 %v429
    %731 = vmatprep.subr.mxu0 %v434
    %732 = vmatpush1.msra.mxu0 %v433
    %733 = vmatprep.subr.mxu0 %v438
    %734 = vmatpush1.msra.mxu0 %v437
    %735 = vmatprep.subr.mxu0 %v442
    %736 = vmatpush1.msra.mxu0 %v441
    %737 = vmatprep.subr.mxu0 %v446
    %738 = vmatpush1.msra.mxu0 %v445
    %739 = vmatprep.subr.mxu0 %v450
    %740 = vmatpush1.msra.mxu0 %v449
    %741 = vmatprep.subr.mxu0 %v454
    %742 = vmatpush1.msra.mxu0 %v453
    %743 = vmatprep.subr.mxu0 %v458
    %744 = vmatpush1.msra.mxu0 %v457
    %745 = vmatprep.subr.mxu0 %v462
    %746 = vmatpush1.msra.mxu0 %v461
    %747 = vmatprep.subr.mxu0 %v466
    %748 = vmatpush1.msra.mxu0 %v465
    %749 = vmatprep.subr.mxu0 0.0
    %750 = vmatpush1.msra.mxu0 0.0
    %751 = vmatprep.subr.mxu0 0.0
    %752 = vmatpush1.msra.mxu0 0.0
    %753 = vmatprep.subr.mxu0 0.0
    %754 = vmatpush1.msra.mxu0 0.0
    %755 = vmatprep.subr.mxu0 0.0
    %756 = vmatpush1.msra.mxu0 0.0
    %757 = vmatprep.subr.mxu0 0.0
    %758 = vmatpush1.msra.mxu0 0.0
    %759 = vmatprep.subr.mxu0 0.0
    %760 = vmatpush1.msra.mxu0 0.0
    %761 = vmatprep.subr.mxu0 0.0
    %762 = vmatpush1.msra.mxu0 0.0
    %763 = vmatprep.subr.mxu0 0.0
    %764 = vmatpush1.msra.mxu0 0.0
    %765 = vmatprep.subr.mxu0 0.0
    %766 = vmatpush1.msra.mxu0 0.0
    %767 = vmatprep.subr.mxu0 0.0
    %768 = vmatpush1.msra.mxu0 0.0
    %769 = vmatprep.subr.mxu0 0.0
    %770 = vmatpush1.msra.mxu0 0.0
    %771 = vmatprep.subr.mxu0 0.0
    %772 = vmatpush1.msra.mxu0 0.0
    %773 = vmatprep.subr.mxu0 0.0
    %774 = vmatpush1.msra.mxu0 0.0
    %775 = vmatprep.subr.mxu0 0.0
    %776 = vmatpush1.msra.mxu0 0.0
    %777 = vmatprep.subr.mxu0 0.0
    %778 = vmatpush1.msra.mxu0 0.0
    %779 = vmatprep.subr.mxu0 0.0
    %780 = vmatpush1.msra.mxu0 0.0
    %781 = vmatprep.mubr.f32.mxu0 0.0
    %782 = vmatmul.mubr.f32.gmra.mrb[0].mxu0 %v640
    %v783 = vpop.f32.mrb[0].mxu0
    %v784 = vadd.f32 0.0, %v783
    %v785 = vpop.f32.mrb[0].mxu0
    %v786 = vadd.f32 0.0, %v785
    %787 = vdwg.mxu0
    %v788 = vadd.f32 %v642, %v713
    %v789 = vadd.f32 %v643, %v715
    %v790 = vadd.f32 %v644, %v784
    %v791 = vadd.f32 %v645, %v786
    %v792 = vxor.u32 %v788, 2147483648
    %v793 = vmul.f32 %v792, 1.442695
    %v794 = vpow.pop %v793
    %v795 = vadd.f32 %v794, 1.0
    %v796 = vrcp.pop %v795
    %v797 = vmul.f32 1.0, %v796
    %v798 = vxor.u32 %v789, 2147483648
    %v799 = vmul.f32 %v798, 1.442695
    %v800 = vpow.pop %v799
    %v801 = vadd.f32 %v800, 1.0
    %v802 = vrcp.pop %v801
    %v803 = vmul.f32 1.0, %v802
    %v804 = vtanh.pop %v790
    %v805 = vxor.u32 %v791, 2147483648
    %v806 = vmul.f32 %v805, 1.442695
    %v807 = vpow.pop %v806
    %v808 = vadd.f32 %v807, 1.0
    %v809 = vrcp.pop %v808
    %v810 = vmul.f32 1.0, %v809
    %v811 = vmul.f32 %v803, %v638
    %v812 = vmul.f32 %v797, %v804
    %v813 = vadd.f32 %v811, %v812
    %v814 = vtanh.pop %v813
    %v815 = vmul.f32 %v810, %v814
    %816 = vst [vmem:[#allocation3 + $0x8] sm:$0xff] %v815
    %v817 = vld [vmem:[#allocation2 + $0x40] sm:$0xff]
    %v818 = vld [vmem:[#allocation2 + $0x48] sm:$0xff]
    %v819 = vld [vmem:[#allocation2 + $0x50] sm:$0xff]
    %v820 = vld [vmem:[#allocation2 + $0x58] sm:$0xff]
    %821 = vmatprep.subr.mxu0 %v404
    %822 = vmatpush1.msra.mxu0 %v403
    %823 = vmatprep.subr.mxu0 %v408
    %824 = vmatpush1.msra.mxu0 %v407
    %825 = vmatprep.subr.mxu0 %v412
    %826 = vmatpush1.msra.mxu0 %v411
    %827 = vmatprep.subr.mxu0 %v416
    %828 = vmatpush1.msra.mxu0 %v415
    %829 = vmatprep.subr.mxu0 %v420
    %830 = vmatpush1.msra.mxu0 %v419
    %831 = vmatprep.subr.mxu0 %v424
    %832 = vmatpush1.msra.mxu0 %v423
    %833 = vmatprep.subr.mxu0 %v428
    %834 = vmatpush1.msra.mxu0 %v427
    %835 = vmatprep.subr.mxu0 %v432
    %836 = vmatpush1.msra.mxu0 %v431
    %837 = vmatprep.subr.mxu0 %v436
    %838 = vmatpush1.msra.mxu0 %v435
    %839 = vmatprep.subr.mxu0 %v440
    %840 = vmatpush1.msra.mxu0 %v439
    %841 = vmatprep.subr.mxu0 %v444
    %842 = vmatpush1.msra.mxu0 %v443
    %843 = vmatprep.subr.mxu0 %v448
    %844 = vmatpush1.msra.mxu0 %v447
    %845 = vmatprep.subr.mxu0 %v452
    %846 = vmatpush1.msra.mxu0 %v451
    %847 = vmatprep.subr.mxu0 %v456
    %848 = vmatpush1.msra.mxu0 %v455
    %849 = vmatprep.subr.mxu0 %v460
    %850 = vmatpush1.msra.mxu0 %v459
    %851 = vmatprep.subr.mxu0 %v464
    %852 = vmatpush1.msra.mxu0 %v463
    %853 = vmatprep.subr.mxu0 0.0
    %854 = vmatpush1.msra.mxu0 0.0
    %855 = vmatprep.subr.mxu0 0.0
    %856 = vmatpush1.msra.mxu0 0.0
    %857 = vmatprep.subr.mxu0 0.0
    %858 = vmatpush1.msra.mxu0 0.0
    %859 = vmatprep.subr.mxu0 0.0
    %860 = vmatpush1.msra.mxu0 0.0
    %861 = vmatprep.subr.mxu0 0.0
    %862 = vmatpush1.msra.mxu0 0.0
    %863 = vmatprep.subr.mxu0 0.0
    %864 = vmatpush1.msra.mxu0 0.0
    %865 = vmatprep.subr.mxu0 0.0
    %866 = vmatpush1.msra.mxu0 0.0
    %867 = vmatprep.subr.mxu0 0.0
    %868 = vmatpush1.msra.mxu0 0.0
    %869 = vmatprep.subr.mxu0 0.0
    %870 = vmatpush1.msra.mxu0 0.0
    %871 = vmatprep.subr.mxu0 0.0
    %872 = vmatpush1.msra.mxu0 0.0
    %873 = vmatprep.subr.mxu0 0.0
    %874 = vmatpush1.msra.mxu0 0.0
    %875 = vmatprep.subr.mxu0 0.0
    %876 = vmatpush1.msra.mxu0 0.0
    %877 = vmatprep.subr.mxu0 0.0
    %878 = vmatpush1.msra.mxu0 0.0
    %879 = vmatprep.subr.mxu0 0.0
    %880 = vmatpush1.msra.mxu0 0.0
    %881 = vmatprep.subr.mxu0 0.0
    %882 = vmatpush1.msra.mxu0 0.0
    %883 = vmatprep.subr.mxu0 0.0
    %884 = vmatpush1.msra.mxu0 0.0
    %885 = vmatprep.mubr.f32.mxu0 0.0
    %886 = vmatmul.mubr.f32.gmra.mrb[0].mxu0 %v815
    %v887 = vpop.f32.mrb[0].mxu0
    %v888 = vadd.f32 0.0, %v887
    %v889 = vpop.f32.mrb[0].mxu0
    %v890 = vadd.f32 0.0, %v889
    %891 = vdwg.mxu0
    %892 = vmatprep.subr.mxu0 %v406
    %893 = vmatpush1.msra.mxu0 %v405
    %894 = vmatprep.subr.mxu0 %v410
    %895 = vmatpush1.msra.mxu0 %v409
    %896 = vmatprep.subr.mxu0 %v414
    %897 = vmatpush1.msra.mxu0 %v413
    %898 = vmatprep.subr.mxu0 %v418
    %899 = vmatpush1.msra.mxu0 %v417
    %900 = vmatprep.subr.mxu0 %v422
    %901 = vmatpush1.msra.mxu0 %v421
    %902 = vmatprep.subr.mxu0 %v426
    %903 = vmatpush1.msra.mxu0 %v425
    %904 = vmatprep.subr.mxu0 %v430
    %905 = vmatpush1.msra.mxu0 %v429
    %906 = vmatprep.subr.mxu0 %v434
    %907 = vmatpush1.msra.mxu0 %v433
    %908 = vmatprep.subr.mxu0 %v438
    %909 = vmatpush1.msra.mxu0 %v437
    %910 = vmatprep.subr.mxu0 %v442
    %911 = vmatpush1.msra.mxu0 %v441
    %912 = vmatprep.subr.mxu0 %v446
    %913 = vmatpush1.msra.mxu0 %v445
    %914 = vmatprep.subr.mxu0 %v450
    %915 = vmatpush1.msra.mxu0 %v449
    %916 = vmatprep.subr.mxu0 %v454
    %917 = vmatpush1.msra.mxu0 %v453
    %918 = vmatprep.subr.mxu0 %v458
    %919 = vmatpush1.msra.mxu0 %v457
    %920 = vmatprep.subr.mxu0 %v462
    %921 = vmatpush1.msra.mxu0 %v461
    %922 = vmatprep.subr.mxu0 %v466
    %923 = vmatpush1.msra.mxu0 %v465
    %924 = vmatprep.subr.mxu0 0.0
    %925 = vmatpush1.msra.mxu0 0.0
    %926 = vmatprep.subr.mxu0 0.0
    %927 = vmatpush1.msra.mxu0 0.0
    %928 = vmatprep.subr.mxu0 0.0
    %929 = vmatpush1.msra.mxu0 0.0
    %930 = vmatprep.subr.mxu0 0.0
    %931 = vmatpush1.msra.mxu0 0.0
    %932 = vmatprep.subr.mxu0 0.0
    %933 = vmatpush1.msra.mxu0 0.0
    %934 = vmatprep.subr.mxu0 0.0
    %935 = vmatpush1.msra.mxu0 0.0
    %936 = vmatprep.subr.mxu0 0.0
    %937 = vmatpush1.msra.mxu0 0.0
    %938 = vmatprep.subr.mxu0 0.0
    %939 = vmatpush1.msra.mxu0 0.0
    %940 = vmatprep.subr.mxu0 0.0
    %941 = vmatpush1.msra.mxu0 0.0
    %942 = vmatprep.subr.mxu0 0.0
    %943 = vmatpush1.msra.mxu0 0.0
    %944 = vmatprep.subr.mxu0 0.0
    %945 = vmatpush1.msra.mxu0 0.0
    %946 = vmatprep.subr.mxu0 0.0
    %947 = vmatpush1.msra.mxu0 0.0
    %948 = vmatprep.subr.mxu0 0.0
    %949 = vmatpush1.msra.mxu0 0.0
    %950 = vmatprep.subr.mxu0 0.0
    %951 = vmatpush1.msra.mxu0 0.0
    %952 = vmatprep.subr.mxu0 0.0
    %953 = vmatpush1.msra.mxu0 0.0
    %954 = vmatprep.subr.mxu0 0.0
    %955 = vmatpush1.msra.mxu0 0.0
    %956 = vmatprep.mubr.f32.mxu0 0.0
    %957 = vmatmul.mubr.f32.gmra.mrb[0].mxu0 %v815
    %v958 = vpop.f32.mrb[0].mxu0
    %v959 = vadd.f32 0.0, %v958
    %v960 = vpop.f32.mrb[0].mxu0
    %v961 = vadd.f32 0.0, %v960
    %962 = vdwg.mxu0
    %v963 = vadd.f32 %v817, %v888
    %v964 = vadd.f32 %v818, %v890
    %v965 = vadd.f32 %v819, %v959
    %v966 = vadd.f32 %v820, %v961
    %v967 = vxor.u32 %v963, 2147483648
    %v968 = vmul.f32 %v967, 1.442695
    %v969 = vpow.pop %v968
    %v970 = vadd.f32 %v969, 1.0
    %v971 = vrcp.pop %v970
    %v972 = vmul.f32 1.0, %v971
    %v973 = vxor.u32 %v964, 2147483648
    %v974 = vmul.f32 %v973, 1.442695
    %v975 = vpow.pop %v974
    %v976 = vadd.f32 %v975, 1.0
    %v977 = vrcp.pop %v976
    %v978 = vmul.f32 1.0, %v977
    %v979 = vtanh.pop %v965
    %v980 = vxor.u32 %v966, 2147483648
    %v981 = vmul.f32 %v980, 1.442695
    %v982 = vpow.pop %v981
    %v983 = vadd.f32 %v982, 1.0
    %v984 = vrcp.pop %v983
    %v985 = vmul.f32 1.0, %v984
    %v986 = vmul.f32 %v978, %v813
    %v987 = vmul.f32 %v972, %v979
    %v988 = vadd.f32 %v986, %v987
    %v989 = vtanh.pop %v988
    %v990 = vmul.f32 %v985, %v989
    %991 = vst [vmem:[#allocation3 + $0x10] sm:$0xff] %v990
    %v992 = vld [vmem:[#allocation2 + $0x60] sm:$0xff]
    %v993 = vld [vmem:[#allocation2 + $0x68] sm:$0xff]
    %v994 = vld [vmem:[#allocation2 + $0x70] sm:$0xff]
    %v995 = vld [vmem:[#allocation2 + $0x78] sm:$0xff]
    %996 = vmatprep.subr.mxu0 %v404
    %997 = vmatpush1.msra.mxu0 %v403
    %998 = vmatprep.subr.mxu0 %v408
    %999 = vmatpush1.msra.mxu0 %v407
    %1000 = vmatprep.subr.mxu0 %v412
    %1001 = vmatpush1.msra.mxu0 %v411
    %1002 = vmatprep.subr.mxu0 %v416
    %1003 = vmatpush1.msra.mxu0 %v415
    %1004 = vmatprep.subr.mxu0 %v420
    %1005 = vmatpush1.msra.mxu0 %v419
    %1006 = vmatprep.subr.mxu0 %v424
    %1007 = vmatpush1.msra.mxu0 %v423
    %1008 = vmatprep.subr.mxu0 %v428
    %1009 = vmatpush1.msra.mxu0 %v427
    %1010 = vmatprep.subr.mxu0 %v432
    %1011 = vmatpush1.msra.mxu0 %v431
    %1012 = vmatprep.subr.mxu0 %v436
    %1013 = vmatpush1.msra.mxu0 %v435
    %1014 = vmatprep.subr.mxu0 %v440
    %1015 = vmatpush1.msra.mxu0 %v439
    %1016 = vmatprep.subr.mxu0 %v444
    %1017 = vmatpush1.msra.mxu0 %v443
    %1018 = vmatprep.subr.mxu0 %v448
    %1019 = vmatpush1.msra.mxu0 %v447
    %1020 = vmatprep.subr.mxu0 %v452
    %1021 = vmatpush1.msra.mxu0 %v451
    %1022 = vmatprep.subr.mxu0 %v456
    %1023 = vmatpush1.msra.mxu0 %v455
    %1024 = vmatprep.subr.mxu0 %v460
    %1025 = vmatpush1.msra.mxu0 %v459
    %1026 = vmatprep.subr.mxu0 %v464
    %1027 = vmatpush1.msra.mxu0 %v463
    %1028 = vmatprep.subr.mxu0 0.0
    %1029 = vmatpush1.msra.mxu0 0.0
    %1030 = vmatprep.subr.mxu0 0.0
    %1031 = vmatpush1.msra.mxu0 0.0
    %1032 = vmatprep.subr.mxu0 0.0
    %1033 = vmatpush1.msra.mxu0 0.0
    %1034 = vmatprep.subr.mxu0 0.0
    %1035 = vmatpush1.msra.mxu0 0.0
    %1036 = vmatprep.subr.mxu0 0.0
    %1037 = vmatpush1.msra.mxu0 0.0
    %1038 = vmatprep.subr.mxu0 0.0
    %1039 = vmatpush1.msra.mxu0 0.0
    %1040 = vmatprep.subr.mxu0 0.0
    %1041 = vmatpush1.msra.mxu0 0.0
    %1042 = vmatprep.subr.mxu0 0.0
    %1043 = vmatpush1.msra.mxu0 0.0
    %1044 = vmatprep.subr.mxu0 0.0
    %1045 = vmatpush1.msra.mxu0 0.0
    %1046 = vmatprep.subr.mxu0 0.0
    %1047 = vmatpush1.msra.mxu0 0.0
    %1048 = vmatprep.subr.mxu0 0.0
    %1049 = vmatpush1.msra.mxu0 0.0
    %1050 = vmatprep.subr.mxu0 0.0
    %1051 = vmatpush1.msra.mxu0 0.0
    %1052 = vmatprep.subr.mxu0 0.0
    %1053 = vmatpush1.msra.mxu0 0.0
    %1054 = vmatprep.subr.mxu0 0.0
    %1055 = vmatpush1.msra.mxu0 0.0
    %1056 = vmatprep.subr.mxu0 0.0
    %1057 = vmatpush1.msra.mxu0 0.0
    %1058 = vmatprep.subr.mxu0 0.0
    %1059 = vmatpush1.msra.mxu0 0.0
    %1060 = vmatprep.mubr.f32.mxu0 0.0
    %1061 = vmatmul.mubr.f32.gmra.mrb[0].mxu0 %v990
    %v1062 = vpop.f32.mrb[0].mxu0
    %v1063 = vadd.f32 0.0, %v1062
    %v1064 = vpop.f32.mrb[0].mxu0
    %v1065 = vadd.f32 0.0, %v1064
    %1066 = vdwg.mxu0
    %1067 = vmatprep.subr.mxu0 %v406
    %1068 = vmatpush1.msra.mxu0 %v405
    %1069 = vmatprep.subr.mxu0 %v410
    %1070 = vmatpush1.msra.mxu0 %v409
    %1071 = vmatprep.subr.mxu0 %v414
    %1072 = vmatpush1.msra.mxu0 %v413
    %1073 = vmatprep.subr.mxu0 %v418
    %1074 = vmatpush1.msra.mxu0 %v417
    %1075 = vmatprep.subr.mxu0 %v422
    %1076 = vmatpush1.msra.mxu0 %v421
    %1077 = vmatprep.subr.mxu0 %v426
    %1078 = vmatpush1.msra.mxu0 %v425
    %1079 = vmatprep.subr.mxu0 %v430
    %1080 = vmatpush1.msra.mxu0 %v429
    %1081 = vmatprep.subr.mxu0 %v434
    %1082 = vmatpush1.msra.mxu0 %v433
    %1083 = vmatprep.subr.mxu0 %v438
    %1084 = vmatpush1.msra.mxu0 %v437
    %1085 = vmatprep.subr.mxu0 %v442
    %1086 = vmatpush1.msra.mxu0 %v441
    %1087 = vmatprep.subr.mxu0 %v446
    %1088 = vmatpush1.msra.mxu0 %v445
    %1089 = vmatprep.subr.mxu0 %v450
    %1090 = vmatpush1.msra.mxu0 %v449
    %1091 = vmatprep.subr.mxu0 %v454
    %1092 = vmatpush1.msra.mxu0 %v453
    %1093 = vmatprep.subr.mxu0 %v458
    %1094 = vmatpush1.msra.mxu0 %v457
    %1095 = vmatprep.subr.mxu0 %v462
    %1096 = vmatpush1.msra.mxu0 %v461
    %1097 = vmatprep.subr.mxu0 %v466
    %1098 = vmatpush1.msra.mxu0 %v465
    %1099 = vmatprep.subr.mxu0 0.0
    %1100 = vmatpush1.msra.mxu0 0.0
    %1101 = vmatprep.subr.mxu0 0.0
    %1102 = vmatpush1.msra.mxu0 0.0
    %1103 = vmatprep.subr.mxu0 0.0
    %1104 = vmatpush1.msra.mxu0 0.0
    %1105 = vmatprep.subr.mxu0 0.0
    %1106 = vmatpush1.msra.mxu0 0.0
    %1107 = vmatprep.subr.mxu0 0.0
    %1108 = vmatpush1.msra.mxu0 0.0
    %1109 = vmatprep.subr.mxu0 0.0
    %1110 = vmatpush1.msra.mxu0 0.0
    %1111 = vmatprep.subr.mxu0 0.0
    %1112 = vmatpush1.msra.mxu0 0.0
    %1113 = vmatprep.subr.mxu0 0.0
    %1114 = vmatpush1.msra.mxu0 0.0
    %1115 = vmatprep.subr.mxu0 0.0
    %1116 = vmatpush1.msra.mxu0 0.0
    %1117 = vmatprep.subr.mxu0 0.0
    %1118 = vmatpush1.msra.mxu0 0.0
    %1119 = vmatprep.subr.mxu0 0.0
    %1120 = vmatpush1.msra.mxu0 0.0
    %1121 = vmatprep.subr.mxu0 0.0
    %1122 = vmatpush1.msra.mxu0 0.0
    %1123 = vmatprep.subr.mxu0 0.0
    %1124 = vmatpush1.msra.mxu0 0.0
    %1125 = vmatprep.subr.mxu0 0.0
    %1126 = vmatpush1.msra.mxu0 0.0
    %1127 = vmatprep.subr.mxu0 0.0
    %1128 = vmatpush1.msra.mxu0 0.0
    %1129 = vmatprep.subr.mxu0 0.0
    %1130 = vmatpush1.msra.mxu0 0.0
    %1131 = vmatprep.mubr.f32.mxu0 0.0
    %1132 = vmatmul.mubr.f32.gmra.mrb[0].mxu0 %v990
    %v1133 = vpop.f32.mrb[0].mxu0
    %v1134 = vadd.f32 0.0, %v1133
    %v1135 = vpop.f32.mrb[0].mxu0
    %v1136 = vadd.f32 0.0, %v1135
    %1137 = vdwg.mxu0
    %v1138 = vadd.f32 %v992, %v1063
    %v1139 = vadd.f32 %v993, %v1065
    %v1140 = vadd.f32 %v994, %v1134
    %v1141 = vadd.f32 %v995, %v1136
    %v1142 = vxor.u32 %v1138, 2147483648
    %v1143 = vmul.f32 %v1142, 1.442695
    %v1144 = vpow.pop %v1143
    %v1145 = vadd.f32 %v1144, 1.0
    %v1146 = vrcp.pop %v1145
    %v1147 = vmul.f32 1.0, %v1146
    %v1148 = vxor.u32 %v1139, 2147483648
    %v1149 = vmul.f32 %v1148, 1.442695
    %v1150 = vpow.pop %v1149
    %v1151 = vadd.f32 %v1150, 1.0
    %v1152 = vrcp.pop %v1151
    %v1153 = vmul.f32 1.0, %v1152
    %v1154 = vtanh.pop %v1140
    %v1155 = vxor.u32 %v1141, 2147483648
    %v1156 = vmul.f32 %v1155, 1.442695
    %v1157 = vpow.pop %v1156
    %v1158 = vadd.f32 %v1157, 1.0
    %v1159 = vrcp.pop %v1158
    %v1160 = vmul.f32 1.0, %v1159
    %v1161 = vmul.f32 %v1153, %v988
    %v1162 = vmul.f32 %v1147, %v1154
    %v1163 = vadd.f32 %v1161, %v1162
    %v1164 = vtanh.pop %v1163
    %v1165 = vmul.f32 %v1160, %v1164
    %1166 = vst [vmem:[#allocation3 + $0x18] sm:$0xff] %v1165
    %v1167 = vld [vmem:[#allocation2 + $0x80] sm:$0xff]
    %v1168 = vld [vmem:[#allocation2 + $0x88] sm:$0xff]
    %v1169 = vld [vmem:[#allocation2 + $0x90] sm:$0xff]
    %v1170 = vld [vmem:[#allocation2 + $0x98] sm:$0xff]
    %1171 = vmatprep.subr.mxu0 %v404
    %1172 = vmatpush1.msra.mxu0 %v403
    %1173 = vmatprep.subr.mxu0 %v408
    %1174 = vmatpush1.msra.mxu0 %v407
    %1175 = vmatprep.subr.mxu0 %v412
    %1176 = vmatpush1.msra.mxu0 %v411
    %1177 = vmatprep.subr.mxu0 %v416
    %1178 = vmatpush1.msra.mxu0 %v415
    %1179 = vmatprep.subr.mxu0 %v420
    %1180 = vmatpush1.msra.mxu0 %v419
    %1181 = vmatprep.subr.mxu0 %v424
    %1182 = vmatpush1.msra.mxu0 %v423
    %1183 = vmatprep.subr.mxu0 %v428
    %1184 = vmatpush1.msra.mxu0 %v427
    %1185 = vmatprep.subr.mxu0 %v432
    %1186 = vmatpush1.msra.mxu0 %v431
    %1187 = vmatprep.subr.mxu0 %v436
    %1188 = vmatpush1.msra.mxu0 %v435
    %1189 = vmatprep.subr.mxu0 %v440
    %1190 = vmatpush1.msra.mxu0 %v439
    %1191 = vmatprep.subr.mxu0 %v444
    %1192 = vmatpush1.msra.mxu0 %v443
    %1193 = vmatprep.subr.mxu0 %v448
    %1194 = vmatpush1.msra.mxu0 %v447
    %1195 = vmatprep.subr.mxu0 %v452
    %1196 = vmatpush1.msra.mxu0 %v451
    %1197 = vmatprep.subr.mxu0 %v456
    %1198 = vmatpush1.msra.mxu0 %v455
    %1199 = vmatprep.subr.mxu0 %v460
    %1200 = vmatpush1.msra.mxu0 %v459
    %1201 = vmatprep.subr.mxu0 %v464
    %1202 = vmatpush1.msra.mxu0 %v463
    %1203 = vmatprep.subr.mxu0 0.0
    %1204 = vmatpush1.msra.mxu0 0.0
    %1205 = vmatprep.subr.mxu0 0.0
    %1206 = vmatpush1.msra.mxu0 0.0
    %1207 = vmatprep.subr.mxu0 0.0
    %1208 = vmatpush1.msra.mxu0 0.0
    %1209 = vmatprep.subr.mxu0 0.0
    %1210 = vmatpush1.msra.mxu0 0.0
    %1211 = vmatprep.subr.mxu0 0.0
    %1212 = vmatpush1.msra.mxu0 0.0
    %1213 = vmatprep.subr.mxu0 0.0
    %1214 = vmatpush1.msra.mxu0 0.0
    %1215 = vmatprep.subr.mxu0 0.0
    %1216 = vmatpush1.msra.mxu0 0.0
    %1217 = vmatprep.subr.mxu0 0.0
    %1218 = vmatpush1.msra.mxu0 0.0
    %1219 = vmatprep.subr.mxu0 0.0
    %1220 = vmatpush1.msra.mxu0 0.0
    %1221 = vmatprep.subr.mxu0 0.0
    %1222 = vmatpush1.msra.mxu0 0.0
    %1223 = vmatprep.subr.mxu0 0.0
    %1224 = vmatpush1.msra.mxu0 0.0
    %1225 = vmatprep.subr.mxu0 0.0
    %1226 = vmatpush1.msra.mxu0 0.0
    %1227 = vmatprep.subr.mxu0 0.0
    %1228 = vmatpush1.msra.mxu0 0.0
    %1229 = vmatprep.subr.mxu0 0.0
    %1230 = vmatpush1.msra.mxu0 0.0
    %1231 = vmatprep.subr.mxu0 0.0
    %1232 = vmatpush1.msra.mxu0 0.0
    %1233 = vmatprep.subr.mxu0 0.0
    %1234 = vmatpush1.msra.mxu0 0.0
    %1235 = vmatprep.mubr.f32.mxu0 0.0
    %1236 = vmatmul.mubr.f32.gmra.mrb[0].mxu0 %v1165
    %v1237 = vpop.f32.mrb[0].mxu0
    %v1238 = vadd.f32 0.0, %v1237
    %v1239 = vpop.f32.mrb[0].mxu0
    %v1240 = vadd.f32 0.0, %v1239
    %1241 = vdwg.mxu0
    %1242 = vmatprep.subr.mxu0 %v406
    %1243 = vmatpush1.msra.mxu0 %v405
    %1244 = vmatprep.subr.mxu0 %v410
    %1245 = vmatpush1.msra.mxu0 %v409
    %1246 = vmatprep.subr.mxu0 %v414
    %1247 = vmatpush1.msra.mxu0 %v413
    %1248 = vmatprep.subr.mxu0 %v418
    %1249 = vmatpush1.msra.mxu0 %v417
    %1250 = vmatprep.subr.mxu0 %v422
    %1251 = vmatpush1.msra.mxu0 %v421
    %1252 = vmatprep.subr.mxu0 %v426
    %1253 = vmatpush1.msra.mxu0 %v425
    %1254 = vmatprep.subr.mxu0 %v430
    %1255 = vmatpush1.msra.mxu0 %v429
    %1256 = vmatprep.subr.mxu0 %v434
    %1257 = vmatpush1.msra.mxu0 %v433
    %1258 = vmatprep.subr.mxu0 %v438
    %1259 = vmatpush1.msra.mxu0 %v437
    %1260 = vmatprep.subr.mxu0 %v442
    %1261 = vmatpush1.msra.mxu0 %v441
    %1262 = vmatprep.subr.mxu0 %v446
    %1263 = vmatpush1.msra.mxu0 %v445
    %1264 = vmatprep.subr.mxu0 %v450
    %1265 = vmatpush1.msra.mxu0 %v449
    %1266 = vmatprep.subr.mxu0 %v454
    %1267 = vmatpush1.msra.mxu0 %v453
    %1268 = vmatprep.subr.mxu0 %v458
    %1269 = vmatpush1.msra.mxu0 %v457
    %1270 = vmatprep.subr.mxu0 %v462
    %1271 = vmatpush1.msra.mxu0 %v461
    %1272 = vmatprep.subr.mxu0 %v466
    %1273 = vmatpush1.msra.mxu0 %v465
    %1274 = vmatprep.subr.mxu0 0.0
    %1275 = vmatpush1.msra.mxu0 0.0
    %1276 = vmatprep.subr.mxu0 0.0
    %1277 = vmatpush1.msra.mxu0 0.0
    %1278 = vmatprep.subr.mxu0 0.0
    %1279 = vmatpush1.msra.mxu0 0.0
    %1280 = vmatprep.subr.mxu0 0.0
    %1281 = vmatpush1.msra.mxu0 0.0
    %1282 = vmatprep.subr.mxu0 0.0
    %1283 = vmatpush1.msra.mxu0 0.0
    %1284 = vmatprep.subr.mxu0 0.0
    %1285 = vmatpush1.msra.mxu0 0.0
    %1286 = vmatprep.subr.mxu0 0.0
    %1287 = vmatpush1.msra.mxu0 0.0
    %1288 = vmatprep.subr.mxu0 0.0
    %1289 = vmatpush1.msra.mxu0 0.0
    %1290 = vmatprep.subr.mxu0 0.0
    %1291 = vmatpush1.msra.mxu0 0.0
    %1292 = vmatprep.subr.mxu0 0.0
    %1293 = vmatpush1.msra.mxu0 0.0
    %1294 = vmatprep.subr.mxu0 0.0
    %1295 = vmatpush1.msra.mxu0 0.0
    %1296 = vmatprep.subr.mxu0 0.0
    %1297 = vmatpush1.msra.mxu0 0.0
    %1298 = vmatprep.subr.mxu0 0.0
    %1299 = vmatpush1.msra.mxu0 0.0
    %1300 = vmatprep.subr.mxu0 0.0
    %1301 = vmatpush1.msra.mxu0 0.0
    %1302 = vmatprep.subr.mxu0 0.0
    %1303 = vmatpush1.msra.mxu0 0.0
    %1304 = vmatprep.subr.mxu0 0.0
    %1305 = vmatpush1.msra.mxu0 0.0
    %1306 = vmatprep.mubr.f32.mxu0 0.0
    %1307 = vmatmul.mubr.f32.gmra.mrb[0].mxu0 %v1165
    %v1308 = vpop.f32.mrb[0].mxu0
    %v1309 = vadd.f32 0.0, %v1308
    %v1310 = vpop.f32.mrb[0].mxu0
    %v1311 = vadd.f32 0.0, %v1310
    %1312 = vdwg.mxu0
    %v1313 = vadd.f32 %v1167, %v1238
    %v1314 = vadd.f32 %v1168, %v1240
    %v1315 = vadd.f32 %v1169, %v1309
    %v1316 = vadd.f32 %v1170, %v1311
    %v1317 = vxor.u32 %v1313, 2147483648
    %v1318 = vmul.f32 %v1317, 1.442695
    %v1319 = vpow.pop %v1318
    %v1320 = vadd.f32 %v1319, 1.0
    %v1321 = vrcp.pop %v1320
    %v1322 = vmul.f32 1.0, %v1321
    %v1323 = vxor.u32 %v1314, 2147483648
    %v1324 = vmul.f32 %v1323, 1.442695
    %v1325 = vpow.pop %v1324
    %v1326 = vadd.f32 %v1325, 1.0
    %v1327 = vrcp.pop %v1326
    %v1328 = vmul.f32 1.0, %v1327
    %v1329 = vtanh.pop %v1315
    %v1330 = vxor.u32 %v1316, 2147483648
    %v1331 = vmul.f32 %v1330, 1.442695
    %v1332 = vpow.pop %v1331
    %v1333 = vadd.f32 %v1332, 1.0
    %v1334 = vrcp.pop %v1333
    %v1335 = vmul.f32 1.0, %v1334
    %v1336 = vmul.f32 %v1328, %v1163
    %v1337 = vmul.f32 %v1322, %v1329
    %v1338 = vadd.f32 %v1336, %v1337
    %v1339 = vtanh.pop %v1338
    %v1340 = vmul.f32 %v1335, %v1339
    %1341 = vst [vmem:[#allocation3 + $0x20] sm:$0xff] %v1340
    %v1342 = vld [vmem:[#allocation2 + $0xa0] sm:$0xff]
    %v1343 = vld [vmem:[#allocation2 + $0xa8] sm:$0xff]
    %v1344 = vld [vmem:[#allocation2 + $0xb0] sm:$0xff]
    %v1345 = vld [vmem:[#allocation2 + $0xb8] sm:$0xff]
    %1346 = vmatprep.subr.mxu0 %v404
    %1347 = vmatpush1.msra.mxu0 %v403
    %1348 = vmatprep.subr.mxu0 %v408
    %1349 = vmatpush1.msra.mxu0 %v407
    %1350 = vmatprep.subr.mxu0 %v412
    %1351 = vmatpush1.msra.mxu0 %v411
    %1352 = vmatprep.subr.mxu0 %v416
    %1353 = vmatpush1.msra.mxu0 %v415
    %1354 = vmatprep.subr.mxu0 %v420
    %1355 = vmatpush1.msra.mxu0 %v419
    %1356 = vmatprep.subr.mxu0 %v424
    %1357 = vmatpush1.msra.mxu0 %v423
    %1358 = vmatprep.subr.mxu0 %v428
    %1359 = vmatpush1.msra.mxu0 %v427
    %1360 = vmatprep.subr.mxu0 %v432
    %1361 = vmatpush1.msra.mxu0 %v431
    %1362 = vmatprep.subr.mxu0 %v436
    %1363 = vmatpush1.msra.mxu0 %v435
    %1364 = vmatprep.subr.mxu0 %v440
    %1365 = vmatpush1.msra.mxu0 %v439
    %1366 = vmatprep.subr.mxu0 %v444
    %1367 = vmatpush1.msra.mxu0 %v443
    %1368 = vmatprep.subr.mxu0 %v448
    %1369 = vmatpush1.msra.mxu0 %v447
    %1370 = vmatprep.subr.mxu0 %v452
    %1371 = vmatpush1.msra.mxu0 %v451
    %1372 = vmatprep.subr.mxu0 %v456
    %1373 = vmatpush1.msra.mxu0 %v455
    %1374 = vmatprep.subr.mxu0 %v460
    %1375 = vmatpush1.msra.mxu0 %v459
    %1376 = vmatprep.subr.mxu0 %v464
    %1377 = vmatpush1.msra.mxu0 %v463
    %1378 = vmatprep.subr.mxu0 0.0
    %1379 = vmatpush1.msra.mxu0 0.0
    %1380 = vmatprep.subr.mxu0 0.0
    %1381 = vmatpush1.msra.mxu0 0.0
    %1382 = vmatprep.subr.mxu0 0.0
    %1383 = vmatpush1.msra.mxu0 0.0
    %1384 = vmatprep.subr.mxu0 0.0
    %1385 = vmatpush1.msra.mxu0 0.0
    %1386 = vmatprep.subr.mxu0 0.0
    %1387 = vmatpush1.msra.mxu0 0.0
    %1388 = vmatprep.subr.mxu0 0.0
    %1389 = vmatpush1.msra.mxu0 0.0
    %1390 = vmatprep.subr.mxu0 0.0
    %1391 = vmatpush1.msra.mxu0 0.0
    %1392 = vmatprep.subr.mxu0 0.0
    %1393 = vmatpush1.msra.mxu0 0.0
    %1394 = vmatprep.subr.mxu0 0.0
    %1395 = vmatpush1.msra.mxu0 0.0
    %1396 = vmatprep.subr.mxu0 0.0
    %1397 = vmatpush1.msra.mxu0 0.0
    %1398 = vmatprep.subr.mxu0 0.0
    %1399 = vmatpush1.msra.mxu0 0.0
    %1400 = vmatprep.subr.mxu0 0.0
    %1401 = vmatpush1.msra.mxu0 0.0
    %1402 = vmatprep.subr.mxu0 0.0
    %1403 = vmatpush1.msra.mxu0 0.0
    %1404 = vmatprep.subr.mxu0 0.0
    %1405 = vmatpush1.msra.mxu0 0.0
    %1406 = vmatprep.subr.mxu0 0.0
    %1407 = vmatpush1.msra.mxu0 0.0
    %1408 = vmatprep.subr.mxu0 0.0
    %1409 = vmatpush1.msra.mxu0 0.0
    %1410 = vmatprep.mubr.f32.mxu0 0.0
    %1411 = vmatmul.mubr.f32.gmra.mrb[0].mxu0 %v1340
    %v1412 = vpop.f32.mrb[0].mxu0
    %v1413 = vadd.f32 0.0, %v1412
    %v1414 = vpop.f32.mrb[0].mxu0
    %v1415 = vadd.f32 0.0, %v1414
    %1416 = vdwg.mxu0
    %1417 = vmatprep.subr.mxu0 %v406
    %1418 = vmatpush1.msra.mxu0 %v405
    %1419 = vmatprep.subr.mxu0 %v410
    %1420 = vmatpush1.msra.mxu0 %v409
    %1421 = vmatprep.subr.mxu0 %v414
    %1422 = vmatpush1.msra.mxu0 %v413
    %1423 = vmatprep.subr.mxu0 %v418
    %1424 = vmatpush1.msra.mxu0 %v417
    %1425 = vmatprep.subr.mxu0 %v422
    %1426 = vmatpush1.msra.mxu0 %v421
    %1427 = vmatprep.subr.mxu0 %v426
    %1428 = vmatpush1.msra.mxu0 %v425
    %1429 = vmatprep.subr.mxu0 %v430
    %1430 = vmatpush1.msra.mxu0 %v429
    %1431 = vmatprep.subr.mxu0 %v434
    %1432 = vmatpush1.msra.mxu0 %v433
    %1433 = vmatprep.subr.mxu0 %v438
    %1434 = vmatpush1.msra.mxu0 %v437
    %1435 = vmatprep.subr.mxu0 %v442
    %1436 = vmatpush1.msra.mxu0 %v441
    %1437 = vmatprep.subr.mxu0 %v446
    %1438 = vmatpush1.msra.mxu0 %v445
    %1439 = vmatprep.subr.mxu0 %v450
    %1440 = vmatpush1.msra.mxu0 %v449
    %1441 = vmatprep.subr.mxu0 %v454
    %1442 = vmatpush1.msra.mxu0 %v453
    %1443 = vmatprep.subr.mxu0 %v458
    %1444 = vmatpush1.msra.mxu0 %v457
    %1445 = vmatprep.subr.mxu0 %v462
    %1446 = vmatpush1.msra.mxu0 %v461
    %1447 = vmatprep.subr.mxu0 %v466
    %1448 = vmatpush1.msra.mxu0 %v465
    %1449 = vmatprep.subr.mxu0 0.0
    %1450 = vmatpush1.msra.mxu0 0.0
    %1451 = vmatprep.subr.mxu0 0.0
    %1452 = vmatpush1.msra.mxu0 0.0
    %1453 = vmatprep.subr.mxu0 0.0
    %1454 = vmatpush1.msra.mxu0 0.0
    %1455 = vmatprep.subr.mxu0 0.0
    %1456 = vmatpush1.msra.mxu0 0.0
    %1457 = vmatprep.subr.mxu0 0.0
    %1458 = vmatpush1.msra.mxu0 0.0
    %1459 = vmatprep.subr.mxu0 0.0
    %1460 = vmatpush1.msra.mxu0 0.0
    %1461 = vmatprep.subr.mxu0 0.0
    %1462 = vmatpush1.msra.mxu0 0.0
    %1463 = vmatprep.subr.mxu0 0.0
    %1464 = vmatpush1.msra.mxu0 0.0
    %1465 = vmatprep.subr.mxu0 0.0
    %1466 = vmatpush1.msra.mxu0 0.0
    %1467 = vmatprep.subr.mxu0 0.0
    %1468 = vmatpush1.msra.mxu0 0.0
    %1469 = vmatprep.subr.mxu0 0.0
    %1470 = vmatpush1.msra.mxu0 0.0
    %1471 = vmatprep.subr.mxu0 0.0
    %1472 = vmatpush1.msra.mxu0 0.0
    %1473 = vmatprep.subr.mxu0 0.0
    %1474 = vmatpush1.msra.mxu0 0.0
    %1475 = vmatprep.subr.mxu0 0.0
    %1476 = vmatpush1.msra.mxu0 0.0
    %1477 = vmatprep.subr.mxu0 0.0
    %1478 = vmatpush1.msra.mxu0 0.0
    %1479 = vmatprep.subr.mxu0 0.0
    %1480 = vmatpush1.msra.mxu0 0.0
    %1481 = vmatprep.mubr.f32.mxu0 0.0
    %1482 = vmatmul.mubr.f32.gmra.mrb[0].mxu0 %v1340
    %v1483 = vpop.f32.mrb[0].mxu0
    %v1484 = vadd.f32 0.0, %v1483
    %v1485 = vpop.f32.mrb[0].mxu0
    %v1486 = vadd.f32 0.0, %v1485
    %1487 = vdwg.mxu0
    %v1488 = vadd.f32 %v1342, %v1413
    %v1489 = vadd.f32 %v1343, %v1415
    %v1490 = vadd.f32 %v1344, %v1484
    %v1491 = vadd.f32 %v1345, %v1486
    %v1492 = vxor.u32 %v1488, 2147483648
    %v1493 = vmul.f32 %v1492, 1.442695
    %v1494 = vpow.pop %v1493
    %v1495 = vadd.f32 %v1494, 1.0
    %v1496 = vrcp.pop %v1495
    %v1497 = vmul.f32 1.0, %v1496
    %v1498 = vxor.u32 %v1489, 2147483648
    %v1499 = vmul.f32 %v1498, 1.442695
    %v1500 = vpow.pop %v1499
    %v1501 = vadd.f32 %v1500, 1.0
    %v1502 = vrcp.pop %v1501
    %v1503 = vmul.f32 1.0, %v1502
    %v1504 = vtanh.pop %v1490
    %v1505 = vxor.u32 %v1491, 2147483648
    %v1506 = vmul.f32 %v1505, 1.442695
    %v1507 = vpow.pop %v1506
    %v1508 = vadd.f32 %v1507, 1.0
    %v1509 = vrcp.pop %v1508
    %v1510 = vmul.f32 1.0, %v1509
    %v1511 = vmul.f32 %v1503, %v1338
    %v1512 = vmul.f32 %v1497, %v1504
    %v1513 = vadd.f32 %v1511, %v1512
    %v1514 = vtanh.pop %v1513
    %v1515 = vmul.f32 %v1510, %v1514
    %1516 = vst [vmem:[#allocation3 + $0x28] sm:$0xff] %v1515
    %v1517 = vld [vmem:[#allocation2 + $0xc0] sm:$0xff]
    %v1518 = vld [vmem:[#allocation2 + $0xc8] sm:$0xff]
    %v1519 = vld [vmem:[#allocation2 + $0xd0] sm:$0xff]
    %v1520 = vld [vmem:[#allocation2 + $0xd8] sm:$0xff]
    %1521 = vmatprep.subr.mxu0 %v404
    %1522 = vmatpush1.msra.mxu0 %v403
    %1523 = vmatprep.subr.mxu0 %v408
    %1524 = vmatpush1.msra.mxu0 %v407
    %1525 = vmatprep.subr.mxu0 %v412
    %1526 = vmatpush1.msra.mxu0 %v411
    %1527 = vmatprep.subr.mxu0 %v416
    %1528 = vmatpush1.msra.mxu0 %v415
    %1529 = vmatprep.subr.mxu0 %v420
    %1530 = vmatpush1.msra.mxu0 %v419
    %1531 = vmatprep.subr.mxu0 %v424
    %1532 = vmatpush1.msra.mxu0 %v423
    %1533 = vmatprep.subr.mxu0 %v428
    %1534 = vmatpush1.msra.mxu0 %v427
    %1535 = vmatprep.subr.mxu0 %v432
    %1536 = vmatpush1.msra.mxu0 %v431
    %1537 = vmatprep.subr.mxu0 %v436
    %1538 = vmatpush1.msra.mxu0 %v435
    %1539 = vmatprep.subr.mxu0 %v440
    %1540 = vmatpush1.msra.mxu0 %v439
    %1541 = vmatprep.subr.mxu0 %v444
    %1542 = vmatpush1.msra.mxu0 %v443
    %1543 = vmatprep.subr.mxu0 %v448
    %1544 = vmatpush1.msra.mxu0 %v447
    %1545 = vmatprep.subr.mxu0 %v452
    %1546 = vmatpush1.msra.mxu0 %v451
    %1547 = vmatprep.subr.mxu0 %v456
    %1548 = vmatpush1.msra.mxu0 %v455
    %1549 = vmatprep.subr.mxu0 %v460
    %1550 = vmatpush1.msra.mxu0 %v459
    %1551 = vmatprep.subr.mxu0 %v464
    %1552 = vmatpush1.msra.mxu0 %v463
    %1553 = vmatprep.subr.mxu0 0.0
    %1554 = vmatpush1.msra.mxu0 0.0
    %1555 = vmatprep.subr.mxu0 0.0
    %1556 = vmatpush1.msra.mxu0 0.0
    %1557 = vmatprep.subr.mxu0 0.0
    %1558 = vmatpush1.msra.mxu0 0.0
    %1559 = vmatprep.subr.mxu0 0.0
    %1560 = vmatpush1.msra.mxu0 0.0
    %1561 = vmatprep.subr.mxu0 0.0
    %1562 = vmatpush1.msra.mxu0 0.0
    %1563 = vmatprep.subr.mxu0 0.0
    %1564 = vmatpush1.msra.mxu0 0.0
    %1565 = vmatprep.subr.mxu0 0.0
    %1566 = vmatpush1.msra.mxu0 0.0
    %1567 = vmatprep.subr.mxu0 0.0
    %1568 = vmatpush1.msra.mxu0 0.0
    %1569 = vmatprep.subr.mxu0 0.0
    %1570 = vmatpush1.msra.mxu0 0.0
    %1571 = vmatprep.subr.mxu0 0.0
    %1572 = vmatpush1.msra.mxu0 0.0
    %1573 = vmatprep.subr.mxu0 0.0
    %1574 = vmatpush1.msra.mxu0 0.0
    %1575 = vmatprep.subr.mxu0 0.0
    %1576 = vmatpush1.msra.mxu0 0.0
    %1577 = vmatprep.subr.mxu0 0.0
    %1578 = vmatpush1.msra.mxu0 0.0
    %1579 = vmatprep.subr.mxu0 0.0
    %1580 = vmatpush1.msra.mxu0 0.0
    %1581 = vmatprep.subr.mxu0 0.0
    %1582 = vmatpush1.msra.mxu0 0.0
    %1583 = vmatprep.subr.mxu0 0.0
    %1584 = vmatpush1.msra.mxu0 0.0
    %1585 = vmatprep.mubr.f32.mxu0 0.0
    %1586 = vmatmul.mubr.f32.gmra.mrb[0].mxu0 %v1515
    %v1587 = vpop.f32.mrb[0].mxu0
    %v1588 = vadd.f32 0.0, %v1587
    %v1589 = vpop.f32.mrb[0].mxu0
    %v1590 = vadd.f32 0.0, %v1589
    %1591 = vdwg.mxu0
    %1592 = vmatprep.subr.mxu0 %v406
    %1593 = vmatpush1.msra.mxu0 %v405
    %1594 = vmatprep.subr.mxu0 %v410
    %1595 = vmatpush1.msra.mxu0 %v409
    %1596 = vmatprep.subr.mxu0 %v414
    %1597 = vmatpush1.msra.mxu0 %v413
    %1598 = vmatprep.subr.mxu0 %v418
    %1599 = vmatpush1.msra.mxu0 %v417
    %1600 = vmatprep.subr.mxu0 %v422
    %1601 = vmatpush1.msra.mxu0 %v421
    %1602 = vmatprep.subr.mxu0 %v426
    %1603 = vmatpush1.msra.mxu0 %v425
    %1604 = vmatprep.subr.mxu0 %v430
    %1605 = vmatpush1.msra.mxu0 %v429
    %1606 = vmatprep.subr.mxu0 %v434
    %1607 = vmatpush1.msra.mxu0 %v433
    %1608 = vmatprep.subr.mxu0 %v438
    %1609 = vmatpush1.msra.mxu0 %v437
    %1610 = vmatprep.subr.mxu0 %v442
    %1611 = vmatpush1.msra.mxu0 %v441
    %1612 = vmatprep.subr.mxu0 %v446
    %1613 = vmatpush1.msra.mxu0 %v445
    %1614 = vmatprep.subr.mxu0 %v450
    %1615 = vmatpush1.msra.mxu0 %v449
    %1616 = vmatprep.subr.mxu0 %v454
    %1617 = vmatpush1.msra.mxu0 %v453
    %1618 = vmatprep.subr.mxu0 %v458
    %1619 = vmatpush1.msra.mxu0 %v457
    %1620 = vmatprep.subr.mxu0 %v462
    %1621 = vmatpush1.msra.mxu0 %v461
    %1622 = vmatprep.subr.mxu0 %v466
    %1623 = vmatpush1.msra.mxu0 %v465
    %1624 = vmatprep.subr.mxu0 0.0
    %1625 = vmatpush1.msra.mxu0 0.0
    %1626 = vmatprep.subr.mxu0 0.0
    %1627 = vmatpush1.msra.mxu0 0.0
    %1628 = vmatprep.subr.mxu0 0.0
    %1629 = vmatpush1.msra.mxu0 0.0
    %1630 = vmatprep.subr.mxu0 0.0
    %1631 = vmatpush1.msra.mxu0 0.0
    %1632 = vmatprep.subr.mxu0 0.0
    %1633 = vmatpush1.msra.mxu0 0.0
    %1634 = vmatprep.subr.mxu0 0.0
    %1635 = vmatpush1.msra.mxu0 0.0
    %1636 = vmatprep.subr.mxu0 0.0
    %1637 = vmatpush1.msra.mxu0 0.0
    %1638 = vmatprep.subr.mxu0 0.0
    %1639 = vmatpush1.msra.mxu0 0.0
    %1640 = vmatprep.subr.mxu0 0.0
    %1641 = vmatpush1.msra.mxu0 0.0
    %1642 = vmatprep.subr.mxu0 0.0
    %1643 = vmatpush1.msra.mxu0 0.0
    %1644 = vmatprep.subr.mxu0 0.0
    %1645 = vmatpush1.msra.mxu0 0.0
    %1646 = vmatprep.subr.mxu0 0.0
    %1647 = vmatpush1.msra.mxu0 0.0
    %1648 = vmatprep.subr.mxu0 0.0
    %1649 = vmatpush1.msra.mxu0 0.0
    %1650 = vmatprep.subr.mxu0 0.0
    %1651 = vmatpush1.msra.mxu0 0.0
    %1652 = vmatprep.subr.mxu0 0.0
    %1653 = vmatpush1.msra.mxu0 0.0
    %1654 = vmatprep.subr.mxu0 0.0
    %1655 = vmatpush1.msra.mxu0 0.0
    %1656 = vmatprep.mubr.f32.mxu0 0.0
    %1657 = vmatmul.mubr.f32.gmra.mrb[0].mxu0 %v1515
    %v1658 = vpop.f32.mrb[0].mxu0
    %v1659 = vadd.f32 0.0, %v1658
    %v1660 = vpop.f32.mrb[0].mxu0
    %v1661 = vadd.f32 0.0, %v1660
    %1662 = vdwg.mxu0
    %v1663 = vadd.f32 %v1517, %v1588
    %v1664 = vadd.f32 %v1518, %v1590
    %v1665 = vadd.f32 %v1519, %v1659
    %v1666 = vadd.f32 %v1520, %v1661
    %v1667 = vxor.u32 %v1663, 2147483648
    %v1668 = vmul.f32 %v1667, 1.442695
    %v1669 = vpow.pop %v1668
    %v1670 = vadd.f32 %v1669, 1.0
    %v1671 = vrcp.pop %v1670
    %v1672 = vmul.f32 1.0, %v1671
    %v1673 = vxor.u32 %v1664, 2147483648
    %v1674 = vmul.f32 %v1673, 1.442695
    %v1675 = vpow.pop %v1674
    %v1676 = vadd.f32 %v1675, 1.0
    %v1677 = vrcp.pop %v1676
    %v1678 = vmul.f32 1.0, %v1677
    %v1679 = vtanh.pop %v1665
    %v1680 = vxor.u32 %v1666, 2147483648
    %v1681 = vmul.f32 %v1680, 1.442695
    %v1682 = vpow.pop %v1681
    %v1683 = vadd.f32 %v1682, 1.0
    %v1684 = vrcp.pop %v1683
    %v1685 = vmul.f32 1.0, %v1684
    %v1686 = vmul.f32 %v1678, %v1513
    %v1687 = vmul.f32 %v1672, %v1679
    %v1688 = vadd.f32 %v1686, %v1687
    %v1689 = vtanh.pop %v1688
    %v1690 = vmul.f32 %v1685, %v1689
    %1691 = vst [vmem:[#allocation3 + $0x30] sm:$0xff] %v1690
    %v1692 = vld [vmem:[#allocation2 + $0xe0] sm:$0xff]
    %v1693 = vld [vmem:[#allocation2 + $0xe8] sm:$0xff]
    %v1694 = vld [vmem:[#allocation2 + $0xf0] sm:$0xff]
    %v1695 = vld [vmem:[#allocation2 + $0xf8] sm:$0xff]
    %1696 = vmatprep.subr.mxu0 %v404
    %1697 = vmatpush1.msra.mxu0 %v403
    %1698 = vmatprep.subr.mxu0 %v408
    %1699 = vmatpush1.msra.mxu0 %v407
    %1700 = vmatprep.subr.mxu0 %v412
    %1701 = vmatpush1.msra.mxu0 %v411
    %1702 = vmatprep.subr.mxu0 %v416
    %1703 = vmatpush1.msra.mxu0 %v415
    %1704 = vmatprep.subr.mxu0 %v420
    %1705 = vmatpush1.msra.mxu0 %v419
    %1706 = vmatprep.subr.mxu0 %v424
    %1707 = vmatpush1.msra.mxu0 %v423
    %1708 = vmatprep.subr.mxu0 %v428
    %1709 = vmatpush1.msra.mxu0 %v427
    %1710 = vmatprep.subr.mxu0 %v432
    %1711 = vmatpush1.msra.mxu0 %v431
    %1712 = vmatprep.subr.mxu0 %v436
    %1713 = vmatpush1.msra.mxu0 %v435
    %1714 = vmatprep.subr.mxu0 %v440
    %1715 = vmatpush1.msra.mxu0 %v439
    %1716 = vmatprep.subr.mxu0 %v444
    %1717 = vmatpush1.msra.mxu0 %v443
    %1718 = vmatprep.subr.mxu0 %v448
    %1719 = vmatpush1.msra.mxu0 %v447
    %1720 = vmatprep.subr.mxu0 %v452
    %1721 = vmatpush1.msra.mxu0 %v451
    %1722 = vmatprep.subr.mxu0 %v456
    %1723 = vmatpush1.msra.mxu0 %v455
    %1724 = vmatprep.subr.mxu0 %v460
    %1725 = vmatpush1.msra.mxu0 %v459
    %1726 = vmatprep.subr.mxu0 %v464
    %1727 = vmatpush1.msra.mxu0 %v463
    %1728 = vmatprep.subr.mxu0 0.0
    %1729 = vmatpush1.msra.mxu0 0.0
    %1730 = vmatprep.subr.mxu0 0.0
    %1731 = vmatpush1.msra.mxu0 0.0
    %1732 = vmatprep.subr.mxu0 0.0
    %1733 = vmatpush1.msra.mxu0 0.0
    %1734 = vmatprep.subr.mxu0 0.0
    %1735 = vmatpush1.msra.mxu0 0.0
    %1736 = vmatprep.subr.mxu0 0.0
    %1737 = vmatpush1.msra.mxu0 0.0
    %1738 = vmatprep.subr.mxu0 0.0
    %1739 = vmatpush1.msra.mxu0 0.0
    %1740 = vmatprep.subr.mxu0 0.0
    %1741 = vmatpush1.msra.mxu0 0.0
    %1742 = vmatprep.subr.mxu0 0.0
    %1743 = vmatpush1.msra.mxu0 0.0
    %1744 = vmatprep.subr.mxu0 0.0
    %1745 = vmatpush1.msra.mxu0 0.0
    %1746 = vmatprep.subr.mxu0 0.0
    %1747 = vmatpush1.msra.mxu0 0.0
    %1748 = vmatprep.subr.mxu0 0.0
    %1749 = vmatpush1.msra.mxu0 0.0
    %1750 = vmatprep.subr.mxu0 0.0
    %1751 = vmatpush1.msra.mxu0 0.0
    %1752 = vmatprep.subr.mxu0 0.0
    %1753 = vmatpush1.msra.mxu0 0.0
    %1754 = vmatprep.subr.mxu0 0.0
    %1755 = vmatpush1.msra.mxu0 0.0
    %1756 = vmatprep.subr.mxu0 0.0
    %1757 = vmatpush1.msra.mxu0 0.0
    %1758 = vmatprep.subr.mxu0 0.0
    %1759 = vmatpush1.msra.mxu0 0.0
    %1760 = vmatprep.mubr.f32.mxu0 0.0
    %1761 = vmatmul.mubr.f32.gmra.mrb[0].mxu0 %v1690
    %v1762 = vpop.f32.mrb[0].mxu0
    %v1763 = vadd.f32 0.0, %v1762
    %v1764 = vpop.f32.mrb[0].mxu0
    %v1765 = vadd.f32 0.0, %v1764
    %1766 = vdwg.mxu0
    %1767 = vmatprep.subr.mxu0 %v406
    %1768 = vmatpush1.msra.mxu0 %v405
    %1769 = vmatprep.subr.mxu0 %v410
    %1770 = vmatpush1.msra.mxu0 %v409
    %1771 = vmatprep.subr.mxu0 %v414
    %1772 = vmatpush1.msra.mxu0 %v413
    %1773 = vmatprep.subr.mxu0 %v418
    %1774 = vmatpush1.msra.mxu0 %v417
    %1775 = vmatprep.subr.mxu0 %v422
    %1776 = vmatpush1.msra.mxu0 %v421
    %1777 = vmatprep.subr.mxu0 %v426
    %1778 = vmatpush1.msra.mxu0 %v425
    %1779 = vmatprep.subr.mxu0 %v430
    %1780 = vmatpush1.msra.mxu0 %v429
    %1781 = vmatprep.subr.mxu0 %v434
    %1782 = vmatpush1.msra.mxu0 %v433
    %1783 = vmatprep.subr.mxu0 %v438
    %1784 = vmatpush1.msra.mxu0 %v437
    %1785 = vmatprep.subr.mxu0 %v442
    %1786 = vmatpush1.msra.mxu0 %v441
    %1787 = vmatprep.subr.mxu0 %v446
    %1788 = vmatpush1.msra.mxu0 %v445
    %1789 = vmatprep.subr.mxu0 %v450
    %1790 = vmatpush1.msra.mxu0 %v449
    %1791 = vmatprep.subr.mxu0 %v454
    %1792 = vmatpush1.msra.mxu0 %v453
    %1793 = vmatprep.subr.mxu0 %v458
    %1794 = vmatpush1.msra.mxu0 %v457
    %1795 = vmatprep.subr.mxu0 %v462
    %1796 = vmatpush1.msra.mxu0 %v461
    %1797 = vmatprep.subr.mxu0 %v466
    %1798 = vmatpush1.msra.mxu0 %v465
    %1799 = vmatprep.subr.mxu0 0.0
    %1800 = vmatpush1.msra.mxu0 0.0
    %1801 = vmatprep.subr.mxu0 0.0
    %1802 = vmatpush1.msra.mxu0 0.0
    %1803 = vmatprep.subr.mxu0 0.0
    %1804 = vmatpush1.msra.mxu0 0.0
    %1805 = vmatprep.subr.mxu0 0.0
    %1806 = vmatpush1.msra.mxu0 0.0
    %1807 = vmatprep.subr.mxu0 0.0
    %1808 = vmatpush1.msra.mxu0 0.0
    %1809 = vmatprep.subr.mxu0 0.0
    %1810 = vmatpush1.msra.mxu0 0.0
    %1811 = vmatprep.subr.mxu0 0.0
    %1812 = vmatpush1.msra.mxu0 0.0
    %1813 = vmatprep.subr.mxu0 0.0
    %1814 = vmatpush1.msra.mxu0 0.0
    %1815 = vmatprep.subr.mxu0 0.0
    %1816 = vmatpush1.msra.mxu0 0.0
    %1817 = vmatprep.subr.mxu0 0.0
    %1818 = vmatpush1.msra.mxu0 0.0
    %1819 = vmatprep.subr.mxu0 0.0
    %1820 = vmatpush1.msra.mxu0 0.0
    %1821 = vmatprep.subr.mxu0 0.0
    %1822 = vmatpush1.msra.mxu0 0.0
    %1823 = vmatprep.subr.mxu0 0.0
    %1824 = vmatpush1.msra.mxu0 0.0
    %1825 = vmatprep.subr.mxu0 0.0
    %1826 = vmatpush1.msra.mxu0 0.0
    %1827 = vmatprep.subr.mxu0 0.0
    %1828 = vmatpush1.msra.mxu0 0.0
    %1829 = vmatprep.subr.mxu0 0.0
    %1830 = vmatpush1.msra.mxu0 0.0
    %1831 = vmatprep.mubr.f32.mxu0 0.0
    %1832 = vmatmul.mubr.f32.gmra.mrb[0].mxu0 %v1690
    %v1833 = vpop.f32.mrb[0].mxu0
    %v1834 = vadd.f32 0.0, %v1833
    %v1835 = vpop.f32.mrb[0].mxu0
    %v1836 = vadd.f32 0.0, %v1835
    %1837 = vdwg.mxu0
    %v1838 = vadd.f32 %v1692, %v1763
    %v1839 = vadd.f32 %v1693, %v1765
    %v1840 = vadd.f32 %v1694, %v1834
    %v1841 = vadd.f32 %v1695, %v1836
    %v1842 = vxor.u32 %v1838, 2147483648
    %v1843 = vmul.f32 %v1842, 1.442695
    %v1844 = vpow.pop %v1843
    %v1845 = vadd.f32 %v1844, 1.0
    %v1846 = vrcp.pop %v1845
    %v1847 = vmul.f32 1.0, %v1846
    %v1848 = vxor.u32 %v1839, 2147483648
    %v1849 = vmul.f32 %v1848, 1.442695
    %v1850 = vpow.pop %v1849
    %v1851 = vadd.f32 %v1850, 1.0
    %v1852 = vrcp.pop %v1851
    %v1853 = vmul.f32 1.0, %v1852
    %v1854 = vtanh.pop %v1840
    %v1855 = vxor.u32 %v1841, 2147483648
    %v1856 = vmul.f32 %v1855, 1.442695
    %v1857 = vpow.pop %v1856
    %v1858 = vadd.f32 %v1857, 1.0
    %v1859 = vrcp.pop %v1858
    %v1860 = vmul.f32 1.0, %v1859
    %v1861 = vmul.f32 %v1853, %v1688
    %v1862 = vmul.f32 %v1847, %v1854
    %v1863 = vadd.f32 %v1861, %v1862
    %v1864 = vtanh.pop %v1863
    %v1865 = vmul.f32 %v1860, %v1864
    %1866 = vst [vmem:[#allocation3 + $0x38] sm:$0xff] %v1865
    %v1867 = vld [vmem:[#allocation3] sm:$0xff]
    %v1868 = vld [vmem:[#allocation3 + $0x8] sm:$0xff]
    %v1869 = vld [vmem:[#allocation3 + $0x10] sm:$0xff]
    %v1870 = vld [vmem:[#allocation3 + $0x18] sm:$0xff]
    %v1871 = vld [vmem:[#allocation3 + $0x20] sm:$0xff]
    %v1872 = vld [vmem:[#allocation3 + $0x28] sm:$0xff]
    %v1873 = vld [vmem:[#allocation3 + $0x30] sm:$0xff]
    %v1874 = vld [vmem:[#allocation3 + $0x38] sm:$0xff]
    %v1875 = vld [vmem:[%s4] sm:$0xff]
    %v1876 = vld [vmem:[%s4 + $0x8] sm:$0xff]
    %v1877 = vld [vmem:[%s4 + $0x10] sm:$0xff]
    %v1878 = vld [vmem:[%s4 + $0x18] sm:$0xff]
    %v1879 = vld [vmem:[%s4 + $0x20] sm:$0xff]
    %v1880 = vld [vmem:[%s4 + $0x28] sm:$0xff]
    %v1881 = vld [vmem:[%s4 + $0x30] sm:$0xff]
    %v1882 = vld [vmem:[%s4 + $0x38] sm:$0xff]
    %v1883 = vld [vmem:[%s4 + $0x40] sm:$0xff]
    %v1884 = vld [vmem:[%s4 + $0x48] sm:$0xff]
    %v1885 = vld [vmem:[%s4 + $0x50] sm:$0xff]
    %v1886 = vld [vmem:[%s4 + $0x58] sm:$0xff]
    %v1887 = vld [vmem:[%s4 + $0x60] sm:$0xff]
    %v1888 = vld [vmem:[%s4 + $0x68] sm:$0xff]
    %v1889 = vld [vmem:[%s4 + $0x70] sm:$0xff]
    %v1890 = vld [vmem:[%s4 + $0x78] sm:$0xff]
    %v1891 = vld [vmem:[%s5] sm:$0x1]
    %v1893 = vlaneseq
    %v1894 = vshrl.u32 %v1893, 7
    %v1895 = vsub.s32 0, %v1894
    %v1896 = vrot.slane %v1891, %v1895
    %1898 = vmatprep.subr.mxu0 0.0
    %1899 = vmatpush1.msra.mxu0 %v1875
    %1900 = vmatprep.subr.mxu0 0.0
    %1901 = vmatpush1.msra.mxu0 %v1876
    %1902 = vmatprep.subr.mxu0 0.0
    %1903 = vmatpush1.msra.mxu0 %v1877
    %1904 = vmatprep.subr.mxu0 0.0
    %1905 = vmatpush1.msra.mxu0 %v1878
    %1906 = vmatprep.subr.mxu0 0.0
    %1907 = vmatpush1.msra.mxu0 %v1879
    %1908 = vmatprep.subr.mxu0 0.0
    %1909 = vmatpush1.msra.mxu0 %v1880
    %1910 = vmatprep.subr.mxu0 0.0
    %1911 = vmatpush1.msra.mxu0 %v1881
    %1912 = vmatprep.subr.mxu0 0.0
    %1913 = vmatpush1.msra.mxu0 %v1882
    %1914 = vmatprep.subr.mxu0 0.0
    %1915 = vmatpush1.msra.mxu0 %v1883
    %1916 = vmatprep.subr.mxu0 0.0
    %1917 = vmatpush1.msra.mxu0 %v1884
    %1918 = vmatprep.subr.mxu0 0.0
    %1919 = vmatpush1.msra.mxu0 %v1885
    %1920 = vmatprep.subr.mxu0 0.0
    %1921 = vmatpush1.msra.mxu0 %v1886
    %1922 = vmatprep.subr.mxu0 0.0
    %1923 = vmatpush1.msra.mxu0 %v1887
    %1924 = vmatprep.subr.mxu0 0.0
    %1925 = vmatpush1.msra.mxu0 %v1888
    %1926 = vmatprep.subr.mxu0 0.0
    %1927 = vmatpush1.msra.mxu0 %v1889
    %1928 = vmatprep.subr.mxu0 0.0
    %1929 = vmatpush1.msra.mxu0 %v1890
    %1930 = vmatprep.subr.mxu0 0.0
    %1931 = vmatpush1.msra.mxu0 0.0
    %1932 = vmatprep.subr.mxu0 0.0
    %1933 = vmatpush1.msra.mxu0 0.0
    %1934 = vmatprep.subr.mxu0 0.0
    %1935 = vmatpush1.msra.mxu0 0.0
    %1936 = vmatprep.subr.mxu0 0.0
    %1937 = vmatpush1.msra.mxu0 0.0
    %1938 = vmatprep.subr.mxu0 0.0
    %1939 = vmatpush1.msra.mxu0 0.0
    %1940 = vmatprep.subr.mxu0 0.0
    %1941 = vmatpush1.msra.mxu0 0.0
    %1942 = vmatprep.subr.mxu0 0.0
    %1943 = vmatpush1.msra.mxu0 0.0
    %1944 = vmatprep.subr.mxu0 0.0
    %1945 = vmatpush1.msra.mxu0 0.0
    %1946 = vmatprep.subr.mxu0 0.0
    %1947 = vmatpush1.msra.mxu0 0.0
    %1948 = vmatprep.subr.mxu0 0.0
    %1949 = vmatpush1.msra.mxu0 0.0
    %1950 = vmatprep.subr.mxu0 0.0
    %1951 = vmatpush1.msra.mxu0 0.0
    %1952 = vmatprep.subr.mxu0 0.0
    %1953 = vmatpush1.msra.mxu0 0.0
    %1954 = vmatprep.subr.mxu0 0.0
    %1955 = vmatpush1.msra.mxu0 0.0
    %1956 = vmatprep.subr.mxu0 0.0
    %1957 = vmatpush1.msra.mxu0 0.0
    %1958 = vmatprep.subr.mxu0 0.0
    %1959 = vmatpush1.msra.mxu0 0.0
    %1960 = vmatprep.subr.mxu0 0.0
    %1961 = vmatpush1.msra.mxu0 0.0
    %1962 = vmatprep.mubr.f32.mxu0 0.0
    %1963 = vmatmul.mubr.f32.gmra.mrb[0].mxu0 %v1867
    %v1964 = vpop.f32.mrb[0].mxu0
    %v1965 = vadd.f32 %v1896, %v1964
    %v1966 = vpop.f32.mrb[0].mxu0
    %1967 = vmatprep.mubr.f32.mxu0 0.0
    %1968 = vmatmul.mubr.f32.gmra.mrb[0].mxu0 %v1868
    %v1969 = vpop.f32.mrb[0].mxu0
    %v1970 = vadd.f32 %v1896, %v1969
    %v1971 = vpop.f32.mrb[0].mxu0
    %1972 = vmatprep.mubr.f32.mxu0 0.0
    %1973 = vmatmul.mubr.f32.gmra.mrb[0].mxu0 %v1869
    %v1974 = vpop.f32.mrb[0].mxu0
    %v1975 = vadd.f32 %v1896, %v1974
    %v1976 = vpop.f32.mrb[0].mxu0
    %1977 = vmatprep.mubr.f32.mxu0 0.0
    %1978 = vmatmul.mubr.f32.gmra.mrb[0].mxu0 %v1870
    %v1979 = vpop.f32.mrb[0].mxu0
    %v1980 = vadd.f32 %v1896, %v1979
    %v1981 = vpop.f32.mrb[0].mxu0
    %1982 = vmatprep.mubr.f32.mxu0 0.0
    %1983 = vmatmul.mubr.f32.gmra.mrb[0].mxu0 %v1871
    %v1984 = vpop.f32.mrb[0].mxu0
    %v1985 = vadd.f32 %v1896, %v1984
    %v1986 = vpop.f32.mrb[0].mxu0
    %1987 = vmatprep.mubr.f32.mxu0 0.0
    %1988 = vmatmul.mubr.f32.gmra.mrb[0].mxu0 %v1872
    %v1989 = vpop.f32.mrb[0].mxu0
    %v1990 = vadd.f32 %v1896, %v1989
    %v1991 = vpop.f32.mrb[0].mxu0
    %1992 = vmatprep.mubr.f32.mxu0 0.0
    %1993 = vmatmul.mubr.f32.gmra.mrb[0].mxu0 %v1873
    %v1994 = vpop.f32.mrb[0].mxu0
    %v1995 = vadd.f32 %v1896, %v1994
    %v1996 = vpop.f32.mrb[0].mxu0
    %1997 = vmatprep.mubr.f32.mxu0 0.0
    %1998 = vmatmul.mubr.f32.gmra.mrb[0].mxu0 %v1874
    %v1999 = vpop.f32.mrb[0].mxu0
    %v2000 = vadd.f32 %v1896, %v1999
    %v2001 = vpop.f32.mrb[0].mxu0
    %2002 = vdwg.mxu0
    %2003 = vst [vmem:[%s6] sm:$0xff] %v1965
    %2004 = vst [vmem:[%s6 + $0x8] sm:$0xff] %v1970
    %2005 = vst [vmem:[%s6 + $0x10] sm:$0xff] %v1975
    %2006 = vst [vmem:[%s6 + $0x18] sm:$0xff] %v1980
    %2007 = vst [vmem:[%s6 + $0x20] sm:$0xff] %v1985
    %2008 = vst [vmem:[%s6 + $0x28] sm:$0xff] %v1990
    %2009 = vst [vmem:[%s6 + $0x30] sm:$0xff] %v1995
    %2010 = vst [vmem:[%s6 + $0x38] sm:$0xff] %v2000
    // Predicated region
    $region34: #{decoder_rnn_forward.1} parent=1 // pred_check
      _
    $region35: #{decoder_rnn_forward.1} parent=1 // pred_check_branch
      %2012 = sbr.rel (0) target = $region37
    $region36: #{decoder_rnn_forward.1} parent=1 // pred_region
      _
    $region37: #{decoder_rnn_forward.1} parent=1 // pred_fallthru
      _
    // Predicated region
    $region38: #{decoder_rnn_forward.1} parent=1 // pred_check
      _
    $region39: #{decoder_rnn_forward.1} parent=1 // pred_check_branch
      %2014 = sbr.rel (0) target = $region41
    $region40: #{decoder_rnn_forward.1} parent=1 // pred_region
      _
    $region41: #{decoder_rnn_forward.1} parent=1 // pred_fallthru
      _
    %2015 = vsyncpa [#allocation5], 1
    %2016 = vsyncpa [#allocation7], 1

</llo_original>
